<compile_context>
chip_gen: v7x
topology: tpu7x:2x2x1
jax: 0.10.0
libtpu: 0.0.40
codegen_flags: <defaults>
</compile_context>

<pallas_src>
import jax
import jax.numpy as jnp
from jax.experimental import pallas as pl
from jax.experimental.pallas import tpu as pltpu


LN_EPS = 1e-5  # nn.LayerNorm default

# Packed small-parameter row layout (every row has width d_model):
#   0: b_feat   1: g_feat   2: beta_feat
#   3..7: w_pos rows for (x1, x2, y1, y2, area)
#   8: b_pos    9: g_pos   10: beta_pos
#  11: img_order_embedding row 0  (n_images == 1 in the module)
_N_SMALL_ROWS = 12


def _layernorm(x, g, b):
    # Single-pass statistics: var = E[x^2] - mu^2 (halves the XLU reductions).
    mu = jnp.mean(x, axis=-1, keepdims=True)
    m2 = jnp.mean(x * x, axis=-1, keepdims=True)
    var = m2 - mu * mu
    return (x - mu) * jax.lax.rsqrt(var + LN_EPS) * g + b


def visual_embedding_kernel(feats_ref, pos_ref, ids_ref, wf_ref, small_ref,
                            objtbl_ref, out_ref):
    # feats_ref : (TM, F)  model-dtype tile (f32 or bf16)
    # pos_ref   : (TM, 4)  f32 tile, layout (x1, x2, y1, y2)
    # ids_ref   : (TM, 1)  int32 tile (already V - id - 1, clamped)
    # wf_ref    : (F, D)   bf16, VMEM resident
    # small_ref : (12, D)  f32,  VMEM resident
    # objtbl_ref: (V, D)   bf16, VMEM resident

    # ---- feat branch: in-kernel bf16 cast feeds the MXU, f32 accumulate, LN ----
    fe = jnp.dot(feats_ref[...].astype(jnp.bfloat16), wf_ref[...],
                 preferred_element_type=jnp.float32)
    fe = _layernorm(fe + small_ref[0:1, :], small_ref[1:2, :], small_ref[2:3, :])

    # ---- pos branch: K=5 projection as VPU broadcast FMAs (kept off the MXU) ----
    pos = pos_ref[...]
    x1 = pos[:, 0:1]
    x2 = pos[:, 1:2]
    y1 = pos[:, 2:3]
    y2 = pos[:, 3:4]
    area = (y2 - y1) * (x2 - x1)                        # (TM, 1)
    pe = (x1 * small_ref[3:4, :] + x2 * small_ref[4:5, :]
          + y1 * small_ref[5:6, :] + y2 * small_ref[6:7, :]
          + area * small_ref[7:8, :] + small_ref[8:9, :])
    pe = _layernorm(pe, small_ref[9:10, :], small_ref[10:11, :])

    # ---- obj order embedding: in-kernel gather via one-hot MXU matmul ----
    tm = ids_ref.shape[0]
    v = objtbl_ref.shape[0]
    iota = jax.lax.broadcasted_iota(jnp.int32, (tm, v), 1)
    onehot = (iota == ids_ref[...]).astype(jnp.bfloat16)        # (TM, V)
    obj_emb = jnp.dot(onehot, objtbl_ref[...], preferred_element_type=jnp.float32)

    # ---- fused epilogue: one lane-dense store, directly in the model dtype ----
    out_ref[...] = (fe + pe + obj_emb + small_ref[11:12, :]).astype(out_ref.dtype)


def _round_up(x, m):
    return -(-x // m) * m


def visual_embedding(feats, pos, params, img_order_ids=None, obj_order_ids=None,
                     tile_m=512, vmem_limit_bytes=None):
    """feats: [B, N, 2048], pos: [B, N, 4] -> [B, N, d_model] (feats.dtype)."""
    B, N, F = feats.shape
    D = params["w_feat"].shape[1]
    V = params["obj_order_table"].shape[0]
    M = B * N

    # ---- per-row int32 obj-order ids (4 B/row instead of a (M, D) f32 array) ----
    if obj_order_ids is None:
        obj_order_ids = jnp.arange(N, dtype=jnp.int32)[None, :]
    obj_ids = V - obj_order_ids.astype(jnp.int32) - 1
    obj_ids = jnp.clip(obj_ids, 0, V - 1)         # JAX-gather clamp semantics
    obj_ids2d = jnp.broadcast_to(obj_ids, (B, N)).reshape(M, 1)

    # img_order_embedding has n_images == 1, so every valid id selects row 0;
    # fold that row into the packed small params (user ids != 0 would clamp to 0).
    # TODO(synk): PyTorch nn.Embedding raises on out-of-range ids; here they clamp.
    small = jnp.concatenate([
        params["b_feat"], params["g_feat"], params["beta_feat"],
        params["w_pos"],                                    # (5, D): x1,x2,y1,y2,area
        params["b_pos"], params["g_pos"], params["beta_pos"],
        params["img_order_table"][0:1, :],
    ], axis=0).astype(jnp.float32)
    assert small.shape == (_N_SMALL_ROWS, D)

    # ---- flatten batch into the matmul M dimension; NO cast, NO pad copies ----
    feats2d = feats.reshape(M, F)                 # stays in model dtype; cast in-kernel
    pos2d = pos.reshape(M, 4).astype(jnp.float32)
    w_feat = params["w_feat"].astype(jnp.bfloat16)          # (F, D) param, VMEM resident
    obj_tbl = params["obj_order_table"].astype(jnp.bfloat16)  # (V, D) param, VMEM resident

    TM = tile_m if M >= tile_m else _round_up(M, 8)
    grid = (pl.cdiv(M, TM),)
    # Ragged last tile: out-of-bounds input rows hold garbage but all math is
    # row-wise and Pallas clips the writeback, so valid rows are unaffected.

    cp_kwargs = dict(dimension_semantics=("parallel",))
    if vmem_limit_bytes is not None:
        cp_kwargs["vmem_limit_bytes"] = vmem_limit_bytes

    out2d = pl.pallas_call(
        visual_embedding_kernel,
        out_shape=jax.ShapeDtypeStruct((M, D), feats.dtype),
        grid=grid,
        in_specs=[
            pl.BlockSpec((TM, F), lambda i: (i, 0)),            # feats tile (model dtype)
            pl.BlockSpec((TM, 4), lambda i: (i, 0)),            # pos tile (f32)
            pl.BlockSpec((TM, 1), lambda i: (i, 0)),            # obj ids tile (int32)
            pl.BlockSpec(memory_space=pltpu.MemorySpace.VMEM),  # w_feat, resident
            pl.BlockSpec(memory_space=pltpu.MemorySpace.VMEM),  # packed params, resident
            pl.BlockSpec(memory_space=pltpu.MemorySpace.VMEM),  # obj order table, resident
        ],
        out_specs=pl.BlockSpec((TM, D), lambda i: (i, 0)),
        compiler_params=pltpu.CompilerParams(**cp_kwargs),
    )(feats2d, pos2d, obj_ids2d, w_feat, small, obj_tbl)

    return out2d.reshape(B, N, D)


def reference(feats, pos, params, img_order_ids=None, obj_order_ids=None,
              bf16_matmul=True):
    """Pure-JAX reference mirroring the PyTorch forward.

    bf16_matmul=True rounds the feats-projection inputs to bf16 to match the
    kernel's bf16 MXU path (accumulation stays f32); the full-f32 PyTorch result
    differs from this by a few 1e-3 after LayerNorm.
    """
    B, N, _ = feats.shape
    D = params["w_feat"].shape[1]
    V = params["obj_order_table"].shape[0]
    if bf16_matmul:
        f = feats.astype(jnp.bfloat16).astype(jnp.float32)
        w = params["w_feat"].astype(jnp.bfloat16).astype(jnp.float32)
    else:
        f, w = feats, params["w_feat"]

    def ln(x, g, b):
        mu = jnp.mean(x, axis=-1, keepdims=True)
        xc = x - mu
        var = jnp.mean(xc * xc, axis=-1, keepdims=True)
        return xc * jax.lax.rsqrt(var + LN_EPS) * g + b

    fe = f @ w + params["b_feat"]
    fe = ln(fe, params["g_feat"], params["beta_feat"])
    # pos layout (x1, x2, y1, y2): area = (y2 - y1) * (x2 - x1)  [VL-T5 get_area]
    area = ((pos[..., 3] - pos[..., 2]) * (pos[..., 1] - pos[..., 0]))[..., None]
    pos5 = jnp.concatenate([pos, area], axis=-1)
    pe = pos5 @ params["w_pos"] + params["b_pos"]
    pe = ln(pe, params["g_pos"], params["beta_pos"])
    if img_order_ids is None:
        img_order_ids = jnp.zeros((1, N), jnp.int32)
    if obj_order_ids is None:
        obj_order_ids = jnp.arange(N, dtype=jnp.int32)[None, :]
    obj_order_ids = V - obj_order_ids - 1
    img_emb = jnp.broadcast_to(params["img_order_table"][img_order_ids], (B, N, D))
    obj_emb = jnp.broadcast_to(params["obj_order_table"][obj_order_ids], (B, N, D))
    return fe + pe + img_emb + obj_emb


if __name__ == "__main__":
    B, N, F, D, V = 2, 8, 2048, 256, 64   # feat_dim=2048 as in the module; d_model=256
    key = jax.random.PRNGKey(0)
    ks = jax.random.split(key, 12)

    feats = jax.random.normal(ks[0], (B, N, F), jnp.float32)
    pos = jax.random.uniform(ks[1], (B, N, 4), jnp.float32)

    params = dict(
        w_feat=0.02 * jax.random.normal(ks[2], (F, D), jnp.float32),
        b_feat=0.01 * jax.random.normal(ks[3], (1, D), jnp.float32),
        g_feat=1.0 + 0.05 * jax.random.normal(ks[4], (1, D), jnp.float32),
        beta_feat=0.01 * jax.random.normal(ks[5], (1, D), jnp.float32),
        w_pos=0.02 * jax.random.normal(ks[6], (5, D), jnp.float32),
        b_pos=0.01 * jax.random.normal(ks[7], (1, D), jnp.float32),
        g_pos=1.0 + 0.05 * jax.random.normal(ks[8], (1, D), jnp.float32),
        beta_pos=0.01 * jax.random.normal(ks[9], (1, D), jnp.float32),
        img_order_table=0.02 * jax.random.normal(ks[10], (1, D), jnp.float32),
        obj_order_table=0.02 * jax.random.normal(ks[11], (V, D), jnp.float32),
    )

    out = visual_embedding(feats, pos, params)
    out = jax.block_until_ready(out)

    ref = reference(feats, pos, params)
    assert out.shape == (B, N, D)
    err = float(jnp.abs(out - ref).max())
    assert jnp.allclose(out, ref, atol=5e-3, rtol=5e-3), err

    print("KERNEL_OK")
</pallas_src>

<mosaic_0001>
module attributes {stable_mosaic.version = 11 : i64} {
  func.func @visual_embedding_kernel(%arg0: i32, %arg1: memref<16x2048xf32, #tpu.memory_space<vmem>>, %arg2: memref<16x4xf32, #tpu.memory_space<vmem>>, %arg3: memref<16x1xi32, #tpu.memory_space<vmem>>, %arg4: memref<2048x256xbf16, #tpu.memory_space<vmem>>, %arg5: memref<12x256xf32, #tpu.memory_space<vmem>>, %arg6: memref<64x256xbf16, #tpu.memory_space<vmem>>, %arg7: memref<16x256xf32, #tpu.memory_space<vmem>>) attributes {dimension_semantics = [#tpu.dimension_semantics<parallel>], iteration_bounds = array<i64: 1>, scalar_prefetch = 0 : i64, scratch_operands = 0 : i64, tpu.core_type = #tpu.core_type<tc>, window_params = [{transform_indices = @transform_0, window_bounds = array<i64: 16, 2048>}, {transform_indices = @transform_1, window_bounds = array<i64: 16, 4>}, {transform_indices = @transform_2, window_bounds = array<i64: 16, 1>}, {pipeline_mode = #tpu.pipeline_mode<synchronous>, transform_indices = @transform_3, window_bounds = array<i64: 2048, 256>}, {pipeline_mode = #tpu.pipeline_mode<synchronous>, transform_indices = @transform_4, window_bounds = array<i64: 12, 256>}, {pipeline_mode = #tpu.pipeline_mode<synchronous>, transform_indices = @transform_5, window_bounds = array<i64: 64, 256>}, {transform_indices = @transform_6, window_bounds = array<i64: 16, 256>}]} {
    %c0 = arith.constant 0 : index
    %c0_0 = arith.constant 0 : index
    %0 = vector.load %arg1[%c0, %c0_0] : memref<16x2048xf32, #tpu.memory_space<vmem>>, vector<16x2048xf32>
    %1 = arith.truncf %0 : vector<16x2048xf32> to vector<16x2048xbf16>
    %c0_1 = arith.constant 0 : index
    %c0_2 = arith.constant 0 : index
    %2 = vector.load %arg4[%c0_1, %c0_2] : memref<2048x256xbf16, #tpu.memory_space<vmem>>, vector<2048x256xbf16>
    %cst = arith.constant dense<0.000000e+00> : vector<16x256xf32>
    %3 = tpu.matmul %1, %2, %cst {dimension_numbers = #tpu.dot_dimension_numbers<[1], [0], [0], [1], [0, 0, 1, 1], [], []>} : vector<16x2048xbf16>, vector<2048x256xbf16>, vector<16x256xf32> -> vector<16x256xf32>
    %c0_3 = arith.constant 0 : index
    %c0_4 = arith.constant 0 : index
    %4 = vector.load %arg5[%c0_3, %c0_4] : memref<12x256xf32, #tpu.memory_space<vmem>>, vector<1x256xf32>
    %5 = vector.broadcast %4 : vector<1x256xf32> to vector<16x256xf32>
    %6 = arith.addf %3, %5 : vector<16x256xf32>
    %c1 = arith.constant 1 : index
    %c0_5 = arith.constant 0 : index
    %7 = vector.load %arg5[%c1, %c0_5] : memref<12x256xf32, #tpu.memory_space<vmem>>, vector<1x256xf32>
    %c2 = arith.constant 2 : index
    %c0_6 = arith.constant 0 : index
    %8 = vector.load %arg5[%c2, %c0_6] : memref<12x256xf32, #tpu.memory_space<vmem>>, vector<1x256xf32>
    %cst_7 = arith.constant dense<0.000000e+00> : vector<16xf32>
    %9 = vector.multi_reduction <add>, %6, %cst_7 [1] : vector<16x256xf32> to vector<16xf32>
    %10 = vector.shape_cast %9 : vector<16xf32> to vector<16x1xf32>
    %cst_8 = arith.constant 2.560000e+02 : f32
    %11 = vector.broadcast %cst_8 : f32 to vector<16x1xf32>
    %12 = arith.divf %10, %11 : vector<16x1xf32>
    %13 = arith.mulf %6, %6 : vector<16x256xf32>
    %cst_9 = arith.constant dense<0.000000e+00> : vector<16xf32>
    %14 = vector.multi_reduction <add>, %13, %cst_9 [1] : vector<16x256xf32> to vector<16xf32>
    %15 = vector.shape_cast %14 : vector<16xf32> to vector<16x1xf32>
    %cst_10 = arith.constant 2.560000e+02 : f32
    %16 = vector.broadcast %cst_10 : f32 to vector<16x1xf32>
    %17 = arith.divf %15, %16 : vector<16x1xf32>
    %18 = arith.mulf %12, %12 : vector<16x1xf32>
    %19 = arith.subf %17, %18 : vector<16x1xf32>
    %20 = vector.broadcast %12 : vector<16x1xf32> to vector<16x256xf32>
    %21 = arith.subf %6, %20 : vector<16x256xf32>
    %cst_11 = arith.constant 9.99999974E-6 : f32
    %22 = vector.broadcast %cst_11 : f32 to vector<16x1xf32>
    %23 = arith.addf %19, %22 : vector<16x1xf32>
    %24 = math.rsqrt %23 : vector<16x1xf32>
    %25 = vector.broadcast %24 : vector<16x1xf32> to vector<16x256xf32>
    %26 = arith.mulf %21, %25 : vector<16x256xf32>
    %27 = vector.broadcast %7 : vector<1x256xf32> to vector<16x256xf32>
    %28 = arith.mulf %26, %27 : vector<16x256xf32>
    %29 = vector.broadcast %8 : vector<1x256xf32> to vector<16x256xf32>
    %30 = arith.addf %28, %29 : vector<16x256xf32>
    %c0_12 = arith.constant 0 : index
    %c0_13 = arith.constant 0 : index
    %31 = vector.load %arg2[%c0_12, %c0_13] : memref<16x4xf32, #tpu.memory_space<vmem>>, vector<16x4xf32>
    %32 = vector.extract_strided_slice %31 {offsets = [0, 0], sizes = [16, 1], strides = [1, 1]} : vector<16x4xf32> to vector<16x1xf32>
    %33 = vector.extract_strided_slice %31 {offsets = [0, 1], sizes = [16, 1], strides = [1, 1]} : vector<16x4xf32> to vector<16x1xf32>
    %34 = vector.extract_strided_slice %31 {offsets = [0, 2], sizes = [16, 1], strides = [1, 1]} : vector<16x4xf32> to vector<16x1xf32>
    %35 = vector.extract_strided_slice %31 {offsets = [0, 3], sizes = [16, 1], strides = [1, 1]} : vector<16x4xf32> to vector<16x1xf32>
    %36 = arith.subf %35, %34 : vector<16x1xf32>
    %37 = arith.subf %33, %32 : vector<16x1xf32>
    %38 = arith.mulf %36, %37 : vector<16x1xf32>
    %c3 = arith.constant 3 : index
    %c0_14 = arith.constant 0 : index
    %39 = vector.load %arg5[%c3, %c0_14] : memref<12x256xf32, #tpu.memory_space<vmem>>, vector<1x256xf32>
    %40 = vector.broadcast %32 : vector<16x1xf32> to vector<16x256xf32>
    %41 = vector.broadcast %39 : vector<1x256xf32> to vector<16x256xf32>
    %42 = arith.mulf %40, %41 : vector<16x256xf32>
    %c4 = arith.constant 4 : index
    %c0_15 = arith.constant 0 : index
    %43 = vector.load %arg5[%c4, %c0_15] : memref<12x256xf32, #tpu.memory_space<vmem>>, vector<1x256xf32>
    %44 = vector.broadcast %33 : vector<16x1xf32> to vector<16x256xf32>
    %45 = vector.broadcast %43 : vector<1x256xf32> to vector<16x256xf32>
    %46 = arith.mulf %44, %45 : vector<16x256xf32>
    %47 = arith.addf %42, %46 : vector<16x256xf32>
    %c5 = arith.constant 5 : index
    %c0_16 = arith.constant 0 : index
    %48 = vector.load %arg5[%c5, %c0_16] : memref<12x256xf32, #tpu.memory_space<vmem>>, vector<1x256xf32>
    %49 = vector.broadcast %34 : vector<16x1xf32> to vector<16x256xf32>
    %50 = vector.broadcast %48 : vector<1x256xf32> to vector<16x256xf32>
    %51 = arith.mulf %49, %50 : vector<16x256xf32>
    %52 = arith.addf %47, %51 : vector<16x256xf32>
    %c6 = arith.constant 6 : index
    %c0_17 = arith.constant 0 : index
    %53 = vector.load %arg5[%c6, %c0_17] : memref<12x256xf32, #tpu.memory_space<vmem>>, vector<1x256xf32>
    %54 = vector.broadcast %35 : vector<16x1xf32> to vector<16x256xf32>
    %55 = vector.broadcast %53 : vector<1x256xf32> to vector<16x256xf32>
    %56 = arith.mulf %54, %55 : vector<16x256xf32>
    %57 = arith.addf %52, %56 : vector<16x256xf32>
    %c7 = arith.constant 7 : index
    %c0_18 = arith.constant 0 : index
    %58 = vector.load %arg5[%c7, %c0_18] : memref<12x256xf32, #tpu.memory_space<vmem>>, vector<1x256xf32>
    %59 = vector.broadcast %38 : vector<16x1xf32> to vector<16x256xf32>
    %60 = vector.broadcast %58 : vector<1x256xf32> to vector<16x256xf32>
    %61 = arith.mulf %59, %60 : vector<16x256xf32>
    %62 = arith.addf %57, %61 : vector<16x256xf32>
    %c8 = arith.constant 8 : index
    %c0_19 = arith.constant 0 : index
    %63 = vector.load %arg5[%c8, %c0_19] : memref<12x256xf32, #tpu.memory_space<vmem>>, vector<1x256xf32>
    %64 = vector.broadcast %63 : vector<1x256xf32> to vector<16x256xf32>
    %65 = arith.addf %62, %64 : vector<16x256xf32>
    %c9 = arith.constant 9 : index
    %c0_20 = arith.constant 0 : index
    %66 = vector.load %arg5[%c9, %c0_20] : memref<12x256xf32, #tpu.memory_space<vmem>>, vector<1x256xf32>
    %c10 = arith.constant 10 : index
    %c0_21 = arith.constant 0 : index
    %67 = vector.load %arg5[%c10, %c0_21] : memref<12x256xf32, #tpu.memory_space<vmem>>, vector<1x256xf32>
    %cst_22 = arith.constant dense<0.000000e+00> : vector<16xf32>
    %68 = vector.multi_reduction <add>, %65, %cst_22 [1] : vector<16x256xf32> to vector<16xf32>
    %69 = vector.shape_cast %68 : vector<16xf32> to vector<16x1xf32>
    %cst_23 = arith.constant 2.560000e+02 : f32
    %70 = vector.broadcast %cst_23 : f32 to vector<16x1xf32>
    %71 = arith.divf %69, %70 : vector<16x1xf32>
    %72 = arith.mulf %65, %65 : vector<16x256xf32>
    %cst_24 = arith.constant dense<0.000000e+00> : vector<16xf32>
    %73 = vector.multi_reduction <add>, %72, %cst_24 [1] : vector<16x256xf32> to vector<16xf32>
    %74 = vector.shape_cast %73 : vector<16xf32> to vector<16x1xf32>
    %cst_25 = arith.constant 2.560000e+02 : f32
    %75 = vector.broadcast %cst_25 : f32 to vector<16x1xf32>
    %76 = arith.divf %74, %75 : vector<16x1xf32>
    %77 = arith.mulf %71, %71 : vector<16x1xf32>
    %78 = arith.subf %76, %77 : vector<16x1xf32>
    %79 = vector.broadcast %71 : vector<16x1xf32> to vector<16x256xf32>
    %80 = arith.subf %65, %79 : vector<16x256xf32>
    %cst_26 = arith.constant 9.99999974E-6 : f32
    %81 = vector.broadcast %cst_26 : f32 to vector<16x1xf32>
    %82 = arith.addf %78, %81 : vector<16x1xf32>
    %83 = math.rsqrt %82 : vector<16x1xf32>
    %84 = vector.broadcast %83 : vector<16x1xf32> to vector<16x256xf32>
    %85 = arith.mulf %80, %84 : vector<16x256xf32>
    %86 = vector.broadcast %66 : vector<1x256xf32> to vector<16x256xf32>
    %87 = arith.mulf %85, %86 : vector<16x256xf32>
    %88 = vector.broadcast %67 : vector<1x256xf32> to vector<16x256xf32>
    %89 = arith.addf %87, %88 : vector<16x256xf32>
    %90 = tpu.iota {dimensions = array<i32: 1>} : vector<16x64xi32>
    %c0_27 = arith.constant 0 : index
    %c0_28 = arith.constant 0 : index
    %91 = vector.load %arg3[%c0_27, %c0_28] : memref<16x1xi32, #tpu.memory_space<vmem>>, vector<16x1xi32>
    %92 = vector.broadcast %91 : vector<16x1xi32> to vector<16x64xi32>
    %93 = arith.cmpi eq, %90, %92 : vector<16x64xi32>
    %94 = arith.extui %93 : vector<16x64xi1> to vector<16x64xi32>
    %95 = arith.sitofp %94 : vector<16x64xi32> to vector<16x64xf32>
    %96 = arith.truncf %95 : vector<16x64xf32> to vector<16x64xbf16>
    %c0_29 = arith.constant 0 : index
    %c0_30 = arith.constant 0 : index
    %97 = vector.load %arg6[%c0_29, %c0_30] : memref<64x256xbf16, #tpu.memory_space<vmem>>, vector<64x256xbf16>
    %cst_31 = arith.constant dense<0.000000e+00> : vector<16x256xf32>
    %98 = tpu.matmul %96, %97, %cst_31 {dimension_numbers = #tpu.dot_dimension_numbers<[1], [0], [0], [1], [0, 0, 1, 1], [], []>} : vector<16x64xbf16>, vector<64x256xbf16>, vector<16x256xf32> -> vector<16x256xf32>
    %99 = arith.addf %30, %89 : vector<16x256xf32>
    %100 = arith.addf %99, %98 : vector<16x256xf32>
    %c11 = arith.constant 11 : index
    %c0_32 = arith.constant 0 : index
    %101 = vector.load %arg5[%c11, %c0_32] : memref<12x256xf32, #tpu.memory_space<vmem>>, vector<1x256xf32>
    %102 = vector.broadcast %101 : vector<1x256xf32> to vector<16x256xf32>
    %103 = arith.addf %100, %102 : vector<16x256xf32>
    %c0_33 = arith.constant 0 : index
    %c0_34 = arith.constant 0 : index
    %104 = vector.load %arg7[%c0_33, %c0_34] : memref<16x256xf32, #tpu.memory_space<vmem>>, vector<16x256xf32>
    tpu.vector_store %arg7[%c0_33, %c0_34], %103 {strides = array<i32>} : memref<16x256xf32, #tpu.memory_space<vmem>>, vector<16x256xf32>,
    return
  }
  func.func @transform_0(%arg0: i32) -> (i32, i32) {
    %c0_i32 = arith.constant 0 : i32
    %c0_i32_0 = arith.constant 0 : i32
    return %arg0, %c0_i32 : i32, i32
  }
  func.func @transform_1(%arg0: i32) -> (i32, i32) {
    %c0_i32 = arith.constant 0 : i32
    %c0_i32_0 = arith.constant 0 : i32
    return %arg0, %c0_i32 : i32, i32
  }
  func.func @transform_2(%arg0: i32) -> (i32, i32) {
    %c0_i32 = arith.constant 0 : i32
    %c0_i32_0 = arith.constant 0 : i32
    return %arg0, %c0_i32 : i32, i32
  }
  func.func @transform_3(%arg0: i32) -> (i32, i32) {
    %c0_i32 = arith.constant 0 : i32
    %c0_i32_0 = arith.constant 0 : i32
    %c0_i32_1 = arith.constant 0 : i32
    return %c0_i32, %c0_i32_0 : i32, i32
  }
  func.func @transform_4(%arg0: i32) -> (i32, i32) {
    %c0_i32 = arith.constant 0 : i32
    %c0_i32_0 = arith.constant 0 : i32
    %c0_i32_1 = arith.constant 0 : i32
    return %c0_i32, %c0_i32_0 : i32, i32
  }
  func.func @transform_5(%arg0: i32) -> (i32, i32) {
    %c0_i32 = arith.constant 0 : i32
    %c0_i32_0 = arith.constant 0 : i32
    %c0_i32_1 = arith.constant 0 : i32
    return %c0_i32, %c0_i32_0 : i32, i32
  }
  func.func @transform_6(%arg0: i32) -> (i32, i32) {
    %c0_i32 = arith.constant 0 : i32
    %c0_i32_0 = arith.constant 0 : i32
    return %arg0, %c0_i32 : i32, i32
  }
}

</mosaic_0001>

<llo_original>
// kernel: tpu_custom_call.1
$region0: #{tpu_custom_call.1}
  #allocation0 [shape = 'u32[]', space=smem, size = 0x4, offset = 0x4, fixed_abs, tag = 'smem constant byte address 0x4 - core index']
  #allocation1 [shape = 'u32[144,128]{1,0:T(1,128)}', space=vmem, size = 0x12000, scoped, tag = 'internal scratch']
  %s0 = inlined_call_operand.hbm [shape: f32[16,2048], index: 0, kind: input, shape index: {}]
  %s1 = inlined_call_operand.vmem [shape: f32[16,4], index: 1, kind: input, shape index: {}]
  %s2 = inlined_call_operand.vmem [shape: s32[16,1], index: 2, kind: input, shape index: {}]
  %s3 = inlined_call_operand.hbm [shape: bf16[2048,256], index: 3, kind: input, shape index: {}]
  %s4 = inlined_call_operand.vmem [shape: f32[12,256], index: 4, kind: input, shape index: {}]
  %s5 = inlined_call_operand.hbm [shape: bf16[64,256], index: 5, kind: input, shape index: {}]
  %s6 = inlined_call_operand.hbm [shape: f32[16,256], index: 6, kind: output, shape index: {}]
  %s7 = sld [smem:[#allocation0]]
  $region46: #{tpu_custom_call.1} parent=0
    _
  %s9 = ssub.s32 1, %s7
  %s10 = scalar_select 0, %s9, %s7
  $region1: #{tpu_custom_call.1} parent=0
    #allocation2 [shape = 'u8[131072]{0}', space=vmem, size = 0x20000, scoped, tag = 'input window, operand 0, single buffered']
    #allocation3 [shape = 's32[1]{0}', space=sflag, size = 0x4, scoped, tag = 'scoped memory for tpu_custom_call.1']
    #allocation4 [shape = 's32[1]{0}', space=sflag, size = 0x4, scoped, tag = 'scoped memory for tpu_custom_call.1']
    #allocation5 [shape = 'u8[1048576]{0}', space=vmem, size = 0x100000, scoped, tag = 'input window, operand 3, single buffered']
    #allocation6 [shape = 's32[1]{0}', space=sflag, size = 0x4, scoped, tag = 'scoped memory for tpu_custom_call.1']
    #allocation7 [shape = 'u8[32768]{0}', space=vmem, size = 0x8000, scoped, tag = 'input window, operand 5, single buffered']
    #allocation8 [shape = 'u8[16384]{0}', space=vmem, size = 0x4000, scoped, tag = 'output window, operand 0, single buffered']
    %11 = vsyncpa [#allocation3], 0
    %12 = vsyncpa [#allocation6], 0
    %13 = vsyncpa [#allocation4], 0
    // Predicated region
    $region2: #{tpu_custom_call.1} parent=1 // pred_check
      _
    $region3: #{tpu_custom_call.1} parent=1 // pred_check_branch
      %15 = sbr.rel (0) target = $region5
    $region4: #{tpu_custom_call.1} parent=1 // pred_region
      %s17 = ssub.s32 4096, 4096
      %18 = vsyncadd [#allocation3], %s17
      %s19 = sshll.u32 [#allocation2], 4
      %s20 = int_to_ptr.vmem [resolvable:$true] %s19
      %25 = dma.hbm_to_vmem [thread:$0]  %s0, 4096, %s20, [#allocation3], 2048, 2048, 128
    $region5: #{tpu_custom_call.1} parent=1 // pred_fallthru
      _
    // Predicated region
    $region6: #{tpu_custom_call.1} parent=1 // pred_check
      _
    $region7: #{tpu_custom_call.1} parent=1 // pred_check_branch
      %27 = sbr.rel (0) target = $region9
    $region8: #{tpu_custom_call.1} parent=1 // pred_region
      _
    $region9: #{tpu_custom_call.1} parent=1 // pred_fallthru
      _
    // Predicated region
    $region10: #{tpu_custom_call.1} parent=1 // pred_check
      _
    $region11: #{tpu_custom_call.1} parent=1 // pred_check_branch
      %29 = sbr.rel (0) target = $region13
    $region12: #{tpu_custom_call.1} parent=1 // pred_region
      _
    $region13: #{tpu_custom_call.1} parent=1 // pred_fallthru
      _
    // Predicated region
    $region14: #{tpu_custom_call.1} parent=1 // pred_check
      _
    $region15: #{tpu_custom_call.1} parent=1 // pred_check_branch
      %31 = sbr.rel (0) target = $region17
    $region16: #{tpu_custom_call.1} parent=1 // pred_region
      %s33 = ssub.s32 32768, 32768
      %34 = vsyncadd [#allocation6], %s33
      %s35 = sshll.u32 [#allocation5], 4
      %s36 = int_to_ptr.vmem [resolvable:$true] %s35
      %41 = dma.hbm_to_vmem [thread:$0]  %s3, 32768, %s36, [#allocation6], 128, 128, 8
    $region17: #{tpu_custom_call.1} parent=1 // pred_fallthru
      _
    // Predicated region
    $region18: #{tpu_custom_call.1} parent=1 // pred_check
      _
    $region19: #{tpu_custom_call.1} parent=1 // pred_check_branch
      %43 = sbr.rel (0) target = $region21
    $region20: #{tpu_custom_call.1} parent=1 // pred_region
      _
    $region21: #{tpu_custom_call.1} parent=1 // pred_fallthru
      _
    // Predicated region
    $region22: #{tpu_custom_call.1} parent=1 // pred_check
      _
    $region23: #{tpu_custom_call.1} parent=1 // pred_check_branch
      %45 = sbr.rel (0) target = $region25
    $region24: #{tpu_custom_call.1} parent=1 // pred_region
      %s47 = ssub.s32 1024, 1024
      %48 = vsyncadd [#allocation6], %s47
      %s49 = sshll.u32 [#allocation7], 4
      %s50 = int_to_ptr.vmem [resolvable:$true] %s49
      %55 = dma.hbm_to_vmem [thread:$0]  %s5, 1024, %s50, [#allocation6], 128, 128, 8
    $region25: #{tpu_custom_call.1} parent=1 // pred_fallthru
      _
    // Predicated region
    $region26: #{tpu_custom_call.1} parent=1 // pred_check
      _
    $region27: #{tpu_custom_call.1} parent=1 // pred_check_branch
      %57 = sbr.rel (0) target = $region29
    $region28: #{tpu_custom_call.1} parent=1 // pred_region
      %58 = dma.done [#allocation3], 4096
    $region29: #{tpu_custom_call.1} parent=1 // pred_fallthru
      _
    // Predicated region
    $region30: #{tpu_custom_call.1} parent=1 // pred_check
      _
    $region31: #{tpu_custom_call.1} parent=1 // pred_check_branch
      %60 = sbr.rel (0) target = $region33
    $region32: #{tpu_custom_call.1} parent=1 // pred_region
      %61 = dma.done [#allocation6], 32768
    $region33: #{tpu_custom_call.1} parent=1 // pred_fallthru
      _
    // Predicated region
    $region34: #{tpu_custom_call.1} parent=1 // pred_check
      _
    $region35: #{tpu_custom_call.1} parent=1 // pred_check_branch
      %63 = sbr.rel (0) target = $region37
    $region36: #{tpu_custom_call.1} parent=1 // pred_region
      %64 = dma.done [#allocation6], 1024
    $region37: #{tpu_custom_call.1} parent=1 // pred_fallthru
      _
    %v66 = vld [vmem:[#allocation2] sm:$0xff]
    %v67 = vld [vmem:[#allocation2 + $0x8] sm:$0xff]
    %v68 = vld [vmem:[#allocation2 + $0x10] sm:$0xff]
    %v69 = vld [vmem:[#allocation2 + $0x18] sm:$0xff]
    %v70 = vld [vmem:[#allocation2 + $0x20] sm:$0xff]
    %v71 = vld [vmem:[#allocation2 + $0x28] sm:$0xff]
    %v72 = vld [vmem:[#allocation2 + $0x30] sm:$0xff]
    %v73 = vld [vmem:[#allocation2 + $0x38] sm:$0xff]
    %v74 = vld [vmem:[#allocation2 + $0x40] sm:$0xff]
    %v75 = vld [vmem:[#allocation2 + $0x48] sm:$0xff]
    %v76 = vld [vmem:[#allocation2 + $0x50] sm:$0xff]
    %v77 = vld [vmem:[#allocation2 + $0x58] sm:$0xff]
    %v78 = vld [vmem:[#allocation2 + $0x60] sm:$0xff]
    %v79 = vld [vmem:[#allocation2 + $0x68] sm:$0xff]
    %v80 = vld [vmem:[#allocation2 + $0x70] sm:$0xff]
    %v81 = vld [vmem:[#allocation2 + $0x78] sm:$0xff]
    %v82 = vld [vmem:[#allocation2 + $0x80] sm:$0xff]
    %v83 = vld [vmem:[#allocation2 + $0x88] sm:$0xff]
    %v84 = vld [vmem:[#allocation2 + $0x90] sm:$0xff]
    %v85 = vld [vmem:[#allocation2 + $0x98] sm:$0xff]
    %v86 = vld [vmem:[#allocation2 + $0xa0] sm:$0xff]
    %v87 = vld [vmem:[#allocation2 + $0xa8] sm:$0xff]
    %v88 = vld [vmem:[#allocation2 + $0xb0] sm:$0xff]
    %v89 = vld [vmem:[#allocation2 + $0xb8] sm:$0xff]
    %v90 = vld [vmem:[#allocation2 + $0xc0] sm:$0xff]
    %v91 = vld [vmem:[#allocation2 + $0xc8] sm:$0xff]
    %v92 = vld [vmem:[#allocation2 + $0xd0] sm:$0xff]
    %v93 = vld [vmem:[#allocation2 + $0xd8] sm:$0xff]
    %v94 = vld [vmem:[#allocation2 + $0xe0] sm:$0xff]
    %v95 = vld [vmem:[#allocation2 + $0xe8] sm:$0xff]
    %v96 = vld [vmem:[#allocation2 + $0xf0] sm:$0xff]
    %v97 = vld [vmem:[#allocation2 + $0xf8] sm:$0xff]
    %v98 = vpack.c.bf16 %v82, %v66
    %v99 = vpack.c.bf16 %v83, %v67
    %v100 = vpack.c.bf16 %v84, %v68
    %v101 = vpack.c.bf16 %v85, %v69
    %v102 = vpack.c.bf16 %v86, %v70
    %v103 = vpack.c.bf16 %v87, %v71
    %v104 = vpack.c.bf16 %v88, %v72
    %v105 = vpack.c.bf16 %v89, %v73
    %v106 = vpack.c.bf16 %v90, %v74
    %v107 = vpack.c.bf16 %v91, %v75
    %v108 = vpack.c.bf16 %v92, %v76
    %v109 = vpack.c.bf16 %v93, %v77
    %v110 = vpack.c.bf16 %v94, %v78
    %v111 = vpack.c.bf16 %v95, %v79
    %v112 = vpack.c.bf16 %v96, %v80
    %v113 = vpack.c.bf16 %v97, %v81
    %v114 = vld [vmem:[#allocation5] sm:$0xff]
    %v115 = vld [vmem:[#allocation5 + $0x8] sm:$0xff]
    %v116 = vld [vmem:[#allocation5 + $0x10] sm:$0xff]
    %v117 = vld [vmem:[#allocation5 + $0x18] sm:$0xff]
    %v118 = vld [vmem:[#allocation5 + $0x20] sm:$0xff]
    %v119 = vld [vmem:[#allocation5 + $0x28] sm:$0xff]
    %v120 = vld [vmem:[#allocation5 + $0x30] sm:$0xff]
    %v121 = vld [vmem:[#allocation5 + $0x38] sm:$0xff]
    %v122 = vld [vmem:[#allocation5 + $0x40] sm:$0xff]
    %v123 = vld [vmem:[#allocation5 + $0x48] sm:$0xff]
    %v124 = vld [vmem:[#allocation5 + $0x50] sm:$0xff]
    %v125 = vld [vmem:[#allocation5 + $0x58] sm:$0xff]
    %v126 = vld [vmem:[#allocation5 + $0x60] sm:$0xff]
    %v127 = vld [vmem:[#allocation5 + $0x68] sm:$0xff]
    %v128 = vld [vmem:[#allocation5 + $0x70] sm:$0xff]
    %v129 = vld [vmem:[#allocation5 + $0x78] sm:$0xff]
    %v130 = vld [vmem:[#allocation5 + $0x80] sm:$0xff]
    %v131 = vld [vmem:[#allocation5 + $0x88] sm:$0xff]
    %v132 = vld [vmem:[#allocation5 + $0x90] sm:$0xff]
    %v133 = vld [vmem:[#allocation5 + $0x98] sm:$0xff]
    %v134 = vld [vmem:[#allocation5 + $0xa0] sm:$0xff]
    %v135 = vld [vmem:[#allocation5 + $0xa8] sm:$0xff]
    %v136 = vld [vmem:[#allocation5 + $0xb0] sm:$0xff]
    %v137 = vld [vmem:[#allocation5 + $0xb8] sm:$0xff]
    %v138 = vld [vmem:[#allocation5 + $0xc0] sm:$0xff]
    %v139 = vld [vmem:[#allocation5 + $0xc8] sm:$0xff]
    %v140 = vld [vmem:[#allocation5 + $0xd0] sm:$0xff]
    %v141 = vld [vmem:[#allocation5 + $0xd8] sm:$0xff]
    %v142 = vld [vmem:[#allocation5 + $0xe0] sm:$0xff]
    %v143 = vld [vmem:[#allocation5 + $0xe8] sm:$0xff]
    %v144 = vld [vmem:[#allocation5 + $0xf0] sm:$0xff]
    %v145 = vld [vmem:[#allocation5 + $0xf8] sm:$0xff]
    %v146 = vld [vmem:[#allocation5 + $0x100] sm:$0xff]
    %v147 = vld [vmem:[#allocation5 + $0x108] sm:$0xff]
    %v148 = vld [vmem:[#allocation5 + $0x110] sm:$0xff]
    %v149 = vld [vmem:[#allocation5 + $0x118] sm:$0xff]
    %v150 = vld [vmem:[#allocation5 + $0x120] sm:$0xff]
    %v151 = vld [vmem:[#allocation5 + $0x128] sm:$0xff]
    %v152 = vld [vmem:[#allocation5 + $0x130] sm:$0xff]
    %v153 = vld [vmem:[#allocation5 + $0x138] sm:$0xff]
    %v154 = vld [vmem:[#allocation5 + $0x140] sm:$0xff]
    %v155 = vld [vmem:[#allocation5 + $0x148] sm:$0xff]
    %v156 = vld [vmem:[#allocation5 + $0x150] sm:$0xff]
    %v157 = vld [vmem:[#allocation5 + $0x158] sm:$0xff]
    %v158 = vld [vmem:[#allocation5 + $0x160] sm:$0xff]
    %v159 = vld [vmem:[#allocation5 + $0x168] sm:$0xff]
    %v160 = vld [vmem:[#allocation5 + $0x170] sm:$0xff]
    %v161 = vld [vmem:[#allocation5 + $0x178] sm:$0xff]
    %v162 = vld [vmem:[#allocation5 + $0x180] sm:$0xff]
    %v163 = vld [vmem:[#allocation5 + $0x188] sm:$0xff]
    %v164 = vld [vmem:[#allocation5 + $0x190] sm:$0xff]
    %v165 = vld [vmem:[#allocation5 + $0x198] sm:$0xff]
    %v166 = vld [vmem:[#allocation5 + $0x1a0] sm:$0xff]
    %v167 = vld [vmem:[#allocation5 + $0x1a8] sm:$0xff]
    %v168 = vld [vmem:[#allocation5 + $0x1b0] sm:$0xff]
    %v169 = vld [vmem:[#allocation5 + $0x1b8] sm:$0xff]
    %v170 = vld [vmem:[#allocation5 + $0x1c0] sm:$0xff]
    %v171 = vld [vmem:[#allocation5 + $0x1c8] sm:$0xff]
    %v172 = vld [vmem:[#allocation5 + $0x1d0] sm:$0xff]
    %v173 = vld [vmem:[#allocation5 + $0x1d8] sm:$0xff]
    %v174 = vld [vmem:[#allocation5 + $0x1e0] sm:$0xff]
    %v175 = vld [vmem:[#allocation5 + $0x1e8] sm:$0xff]
    %v176 = vld [vmem:[#allocation5 + $0x1f0] sm:$0xff]
    %v177 = vld [vmem:[#allocation5 + $0x1f8] sm:$0xff]
    %v178 = vld [vmem:[#allocation5 + $0x200] sm:$0xff]
    %v179 = vld [vmem:[#allocation5 + $0x208] sm:$0xff]
    %v180 = vld [vmem:[#allocation5 + $0x210] sm:$0xff]
    %v181 = vld [vmem:[#allocation5 + $0x218] sm:$0xff]
    %v182 = vld [vmem:[#allocation5 + $0x220] sm:$0xff]
    %v183 = vld [vmem:[#allocation5 + $0x228] sm:$0xff]
    %v184 = vld [vmem:[#allocation5 + $0x230] sm:$0xff]
    %v185 = vld [vmem:[#allocation5 + $0x238] sm:$0xff]
    %v186 = vld [vmem:[#allocation5 + $0x240] sm:$0xff]
    %v187 = vld [vmem:[#allocation5 + $0x248] sm:$0xff]
    %v188 = vld [vmem:[#allocation5 + $0x250] sm:$0xff]
    %v189 = vld [vmem:[#allocation5 + $0x258] sm:$0xff]
    %v190 = vld [vmem:[#allocation5 + $0x260] sm:$0xff]
    %v191 = vld [vmem:[#allocation5 + $0x268] sm:$0xff]
    %v192 = vld [vmem:[#allocation5 + $0x270] sm:$0xff]
    %v193 = vld [vmem:[#allocation5 + $0x278] sm:$0xff]
    %v194 = vld [vmem:[#allocation5 + $0x280] sm:$0xff]
    %v195 = vld [vmem:[#allocation5 + $0x288] sm:$0xff]
    %v196 = vld [vmem:[#allocation5 + $0x290] sm:$0xff]
    %v197 = vld [vmem:[#allocation5 + $0x298] sm:$0xff]
    %v198 = vld [vmem:[#allocation5 + $0x2a0] sm:$0xff]
    %v199 = vld [vmem:[#allocation5 + $0x2a8] sm:$0xff]
    %v200 = vld [vmem:[#allocation5 + $0x2b0] sm:$0xff]
    %v201 = vld [vmem:[#allocation5 + $0x2b8] sm:$0xff]
    %v202 = vld [vmem:[#allocation5 + $0x2c0] sm:$0xff]
    %v203 = vld [vmem:[#allocation5 + $0x2c8] sm:$0xff]
    %v204 = vld [vmem:[#allocation5 + $0x2d0] sm:$0xff]
    %v205 = vld [vmem:[#allocation5 + $0x2d8] sm:$0xff]
    %v206 = vld [vmem:[#allocation5 + $0x2e0] sm:$0xff]
    %v207 = vld [vmem:[#allocation5 + $0x2e8] sm:$0xff]
    %v208 = vld [vmem:[#allocation5 + $0x2f0] sm:$0xff]
    %v209 = vld [vmem:[#allocation5 + $0x2f8] sm:$0xff]
    %v210 = vld [vmem:[#allocation5 + $0x300] sm:$0xff]
    %v211 = vld [vmem:[#allocation5 + $0x308] sm:$0xff]
    %v212 = vld [vmem:[#allocation5 + $0x310] sm:$0xff]
    %v213 = vld [vmem:[#allocation5 + $0x318] sm:$0xff]
    %v214 = vld [vmem:[#allocation5 + $0x320] sm:$0xff]
    %v215 = vld [vmem:[#allocation5 + $0x328] sm:$0xff]
    %v216 = vld [vmem:[#allocation5 + $0x330] sm:$0xff]
    %v217 = vld [vmem:[#allocation5 + $0x338] sm:$0xff]
    %v218 = vld [vmem:[#allocation5 + $0x340] sm:$0xff]
    %v219 = vld [vmem:[#allocation5 + $0x348] sm:$0xff]
    %v220 = vld [vmem:[#allocation5 + $0x350] sm:$0xff]
    %v221 = vld [vmem:[#allocation5 + $0x358] sm:$0xff]
    %v222 = vld [vmem:[#allocation5 + $0x360] sm:$0xff]
    %v223 = vld [vmem:[#allocation5 + $0x368] sm:$0xff]
    %v224 = vld [vmem:[#allocation5 + $0x370] sm:$0xff]
    %v225 = vld [vmem:[#allocation5 + $0x378] sm:$0xff]
    %v226 = vld [vmem:[#allocation5 + $0x380] sm:$0xff]
    %v227 = vld [vmem:[#allocation5 + $0x388] sm:$0xff]
    %v228 = vld [vmem:[#allocation5 + $0x390] sm:$0xff]
    %v229 = vld [vmem:[#allocation5 + $0x398] sm:$0xff]
    %v230 = vld [vmem:[#allocation5 + $0x3a0] sm:$0xff]
    %v231 = vld [vmem:[#allocation5 + $0x3a8] sm:$0xff]
    %v232 = vld [vmem:[#allocation5 + $0x3b0] sm:$0xff]
    %v233 = vld [vmem:[#allocation5 + $0x3b8] sm:$0xff]
    %v234 = vld [vmem:[#allocation5 + $0x3c0] sm:$0xff]
    %v235 = vld [vmem:[#allocation5 + $0x3c8] sm:$0xff]
    %v236 = vld [vmem:[#allocation5 + $0x3d0] sm:$0xff]
    %v237 = vld [vmem:[#allocation5 + $0x3d8] sm:$0xff]
    %v238 = vld [vmem:[#allocation5 + $0x3e0] sm:$0xff]
    %v239 = vld [vmem:[#allocation5 + $0x3e8] sm:$0xff]
    %v240 = vld [vmem:[#allocation5 + $0x3f0] sm:$0xff]
    %v241 = vld [vmem:[#allocation5 + $0x3f8] sm:$0xff]
    %v242 = vld [vmem:[#allocation5 + $0x400] sm:$0xff]
    %v243 = vld [vmem:[#allocation5 + $0x408] sm:$0xff]
    %v244 = vld [vmem:[#allocation5 + $0x410] sm:$0xff]
    %v245 = vld [vmem:[#allocation5 + $0x418] sm:$0xff]
    %v246 = vld [vmem:[#allocation5 + $0x420] sm:$0xff]
    %v247 = vld [vmem:[#allocation5 + $0x428] sm:$0xff]
    %v248 = vld [vmem:[#allocation5 + $0x430] sm:$0xff]
    %v249 = vld [vmem:[#allocation5 + $0x438] sm:$0xff]
    %v250 = vld [vmem:[#allocation5 + $0x440] sm:$0xff]
    %v251 = vld [vmem:[#allocation5 + $0x448] sm:$0xff]
    %v252 = vld [vmem:[#allocation5 + $0x450] sm:$0xff]
    %v253 = vld [vmem:[#allocation5 + $0x458] sm:$0xff]
    %v254 = vld [vmem:[#allocation5 + $0x460] sm:$0xff]
    %v255 = vld [vmem:[#allocation5 + $0x468] sm:$0xff]
    %v256 = vld [vmem:[#allocation5 + $0x470] sm:$0xff]
    %v257 = vld [vmem:[#allocation5 + $0x478] sm:$0xff]
    %v258 = vld [vmem:[#allocation5 + $0x480] sm:$0xff]
    %v259 = vld [vmem:[#allocation5 + $0x488] sm:$0xff]
    %v260 = vld [vmem:[#allocation5 + $0x490] sm:$0xff]
    %v261 = vld [vmem:[#allocation5 + $0x498] sm:$0xff]
    %v262 = vld [vmem:[#allocation5 + $0x4a0] sm:$0xff]
    %v263 = vld [vmem:[#allocation5 + $0x4a8] sm:$0xff]
    %v264 = vld [vmem:[#allocation5 + $0x4b0] sm:$0xff]
    %v265 = vld [vmem:[#allocation5 + $0x4b8] sm:$0xff]
    %v266 = vld [vmem:[#allocation5 + $0x4c0] sm:$0xff]
    %v267 = vld [vmem:[#allocation5 + $0x4c8] sm:$0xff]
    %v268 = vld [vmem:[#allocation5 + $0x4d0] sm:$0xff]
    %v269 = vld [vmem:[#allocation5 + $0x4d8] sm:$0xff]
    %v270 = vld [vmem:[#allocation5 + $0x4e0] sm:$0xff]
    %v271 = vld [vmem:[#allocation5 + $0x4e8] sm:$0xff]
    %v272 = vld [vmem:[#allocation5 + $0x4f0] sm:$0xff]
    %v273 = vld [vmem:[#allocation5 + $0x4f8] sm:$0xff]
    %v274 = vld [vmem:[#allocation5 + $0x500] sm:$0xff]
    %v275 = vld [vmem:[#allocation5 + $0x508] sm:$0xff]
    %v276 = vld [vmem:[#allocation5 + $0x510] sm:$0xff]
    %v277 = vld [vmem:[#allocation5 + $0x518] sm:$0xff]
    %v278 = vld [vmem:[#allocation5 + $0x520] sm:$0xff]
    %v279 = vld [vmem:[#allocation5 + $0x528] sm:$0xff]
    %v280 = vld [vmem:[#allocation5 + $0x530] sm:$0xff]
    %v281 = vld [vmem:[#allocation5 + $0x538] sm:$0xff]
    %v282 = vld [vmem:[#allocation5 + $0x540] sm:$0xff]
    %v283 = vld [vmem:[#allocation5 + $0x548] sm:$0xff]
    %v284 = vld [vmem:[#allocation5 + $0x550] sm:$0xff]
    %v285 = vld [vmem:[#allocation5 + $0x558] sm:$0xff]
    %v286 = vld [vmem:[#allocation5 + $0x560] sm:$0xff]
    %v287 = vld [vmem:[#allocation5 + $0x568] sm:$0xff]
    %v288 = vld [vmem:[#allocation5 + $0x570] sm:$0xff]
    %v289 = vld [vmem:[#allocation5 + $0x578] sm:$0xff]
    %v290 = vld [vmem:[#allocation5 + $0x580] sm:$0xff]
    %v291 = vld [vmem:[#allocation5 + $0x588] sm:$0xff]
    %v292 = vld [vmem:[#allocation5 + $0x590] sm:$0xff]
    %v293 = vld [vmem:[#allocation5 + $0x598] sm:$0xff]
    %v294 = vld [vmem:[#allocation5 + $0x5a0] sm:$0xff]
    %v295 = vld [vmem:[#allocation5 + $0x5a8] sm:$0xff]
    %v296 = vld [vmem:[#allocation5 + $0x5b0] sm:$0xff]
    %v297 = vld [vmem:[#allocation5 + $0x5b8] sm:$0xff]
    %v298 = vld [vmem:[#allocation5 + $0x5c0] sm:$0xff]
    %v299 = vld [vmem:[#allocation5 + $0x5c8] sm:$0xff]
    %v300 = vld [vmem:[#allocation5 + $0x5d0] sm:$0xff]
    %v301 = vld [vmem:[#allocation5 + $0x5d8] sm:$0xff]
    %v302 = vld [vmem:[#allocation5 + $0x5e0] sm:$0xff]
    %v303 = vld [vmem:[#allocation5 + $0x5e8] sm:$0xff]
    %v304 = vld [vmem:[#allocation5 + $0x5f0] sm:$0xff]
    %v305 = vld [vmem:[#allocation5 + $0x5f8] sm:$0xff]
    %v306 = vld [vmem:[#allocation5 + $0x600] sm:$0xff]
    %v307 = vld [vmem:[#allocation5 + $0x608] sm:$0xff]
    %v308 = vld [vmem:[#allocation5 + $0x610] sm:$0xff]
    %v309 = vld [vmem:[#allocation5 + $0x618] sm:$0xff]
    %v310 = vld [vmem:[#allocation5 + $0x620] sm:$0xff]
    %v311 = vld [vmem:[#allocation5 + $0x628] sm:$0xff]
    %v312 = vld [vmem:[#allocation5 + $0x630] sm:$0xff]
    %v313 = vld [vmem:[#allocation5 + $0x638] sm:$0xff]
    %v314 = vld [vmem:[#allocation5 + $0x640] sm:$0xff]
    %v315 = vld [vmem:[#allocation5 + $0x648] sm:$0xff]
    %v316 = vld [vmem:[#allocation5 + $0x650] sm:$0xff]
    %v317 = vld [vmem:[#allocation5 + $0x658] sm:$0xff]
    %v318 = vld [vmem:[#allocation5 + $0x660] sm:$0xff]
    %v319 = vld [vmem:[#allocation5 + $0x668] sm:$0xff]
    %v320 = vld [vmem:[#allocation5 + $0x670] sm:$0xff]
    %v321 = vld [vmem:[#allocation5 + $0x678] sm:$0xff]
    %v322 = vld [vmem:[#allocation5 + $0x680] sm:$0xff]
    %v323 = vld [vmem:[#allocation5 + $0x688] sm:$0xff]
    %v324 = vld [vmem:[#allocation5 + $0x690] sm:$0xff]
    %v325 = vld [vmem:[#allocation5 + $0x698] sm:$0xff]
    %v326 = vld [vmem:[#allocation5 + $0x6a0] sm:$0xff]
    %v327 = vld [vmem:[#allocation5 + $0x6a8] sm:$0xff]
    %v328 = vld [vmem:[#allocation5 + $0x6b0] sm:$0xff]
    %v329 = vld [vmem:[#allocation5 + $0x6b8] sm:$0xff]
    %v330 = vld [vmem:[#allocation5 + $0x6c0] sm:$0xff]
    %v331 = vld [vmem:[#allocation5 + $0x6c8] sm:$0xff]
    %v332 = vld [vmem:[#allocation5 + $0x6d0] sm:$0xff]
    %v333 = vld [vmem:[#allocation5 + $0x6d8] sm:$0xff]
    %v334 = vld [vmem:[#allocation5 + $0x6e0] sm:$0xff]
    %v335 = vld [vmem:[#allocation5 + $0x6e8] sm:$0xff]
    %v336 = vld [vmem:[#allocation5 + $0x6f0] sm:$0xff]
    %v337 = vld [vmem:[#allocation5 + $0x6f8] sm:$0xff]
    %v338 = vld [vmem:[#allocation5 + $0x700] sm:$0xff]
    %v339 = vld [vmem:[#allocation5 + $0x708] sm:$0xff]
    %v340 = vld [vmem:[#allocation5 + $0x710] sm:$0xff]
    %v341 = vld [vmem:[#allocation5 + $0x718] sm:$0xff]
    %v342 = vld [vmem:[#allocation5 + $0x720] sm:$0xff]
    %v343 = vld [vmem:[#allocation5 + $0x728] sm:$0xff]
    %v344 = vld [vmem:[#allocation5 + $0x730] sm:$0xff]
    %v345 = vld [vmem:[#allocation5 + $0x738] sm:$0xff]
    %v346 = vld [vmem:[#allocation5 + $0x740] sm:$0xff]
    %v347 = vld [vmem:[#allocation5 + $0x748] sm:$0xff]
    %v348 = vld [vmem:[#allocation5 + $0x750] sm:$0xff]
    %v349 = vld [vmem:[#allocation5 + $0x758] sm:$0xff]
    %v350 = vld [vmem:[#allocation5 + $0x760] sm:$0xff]
    %v351 = vld [vmem:[#allocation5 + $0x768] sm:$0xff]
    %v352 = vld [vmem:[#allocation5 + $0x770] sm:$0xff]
    %v353 = vld [vmem:[#allocation5 + $0x778] sm:$0xff]
    %v354 = vld [vmem:[#allocation5 + $0x780] sm:$0xff]
    %v355 = vld [vmem:[#allocation5 + $0x788] sm:$0xff]
    %v356 = vld [vmem:[#allocation5 + $0x790] sm:$0xff]
    %v357 = vld [vmem:[#allocation5 + $0x798] sm:$0xff]
    %v358 = vld [vmem:[#allocation5 + $0x7a0] sm:$0xff]
    %v359 = vld [vmem:[#allocation5 + $0x7a8] sm:$0xff]
    %v360 = vld [vmem:[#allocation5 + $0x7b0] sm:$0xff]
    %v361 = vld [vmem:[#allocation5 + $0x7b8] sm:$0xff]
    %v362 = vld [vmem:[#allocation5 + $0x7c0] sm:$0xff]
    %v363 = vld [vmem:[#allocation5 + $0x7c8] sm:$0xff]
    %v364 = vld [vmem:[#allocation5 + $0x7d0] sm:$0xff]
    %v365 = vld [vmem:[#allocation5 + $0x7d8] sm:$0xff]
    %v366 = vld [vmem:[#allocation5 + $0x7e0] sm:$0xff]
    %v367 = vld [vmem:[#allocation5 + $0x7e8] sm:$0xff]
    %v368 = vld [vmem:[#allocation5 + $0x7f0] sm:$0xff]
    %v369 = vld [vmem:[#allocation5 + $0x7f8] sm:$0xff]
    %v370 = vld [vmem:[%s4] ss:$8 sm:$0x3]
    %v372 = vlaneseq
    %v373 = vshrl.u32 %v372, 7
    %v374 = vsub.s32 0, %v373
    %v375 = vrot.slane %v370, %v374
    %v376 = vlaneseq
    %v377 = vshrl.u32 %v376, 7
    %v378 = vsub.s32 1, %v377
    %v379 = vrot.slane %v370, %v378
    %v638 = vunpack.c.l.b16 %v114
    %v639 = vunpack.c.h.b16 %v114
    %v640 = vunpack.c.l.b16 %v115
    %v641 = vunpack.c.h.b16 %v115
    %v642 = vunpack.c.l.b16 %v116
    %v643 = vunpack.c.h.b16 %v116
    %v644 = vunpack.c.l.b16 %v117
    %v645 = vunpack.c.h.b16 %v117
    %v646 = vunpack.c.l.b16 %v118
    %v647 = vunpack.c.h.b16 %v118
    %v648 = vunpack.c.l.b16 %v119
    %v649 = vunpack.c.h.b16 %v119
    %v650 = vunpack.c.l.b16 %v120
    %v651 = vunpack.c.h.b16 %v120
    %v652 = vunpack.c.l.b16 %v121
    %v653 = vunpack.c.h.b16 %v121
    %v654 = vunpack.c.l.b16 %v122
    %v655 = vunpack.c.h.b16 %v122
    %v656 = vunpack.c.l.b16 %v123
    %v657 = vunpack.c.h.b16 %v123
    %v658 = vunpack.c.l.b16 %v124
    %v659 = vunpack.c.h.b16 %v124
    %v660 = vunpack.c.l.b16 %v125
    %v661 = vunpack.c.h.b16 %v125
    %v662 = vunpack.c.l.b16 %v126
    %v663 = vunpack.c.h.b16 %v126
    %v664 = vunpack.c.l.b16 %v127
    %v665 = vunpack.c.h.b16 %v127
    %v666 = vunpack.c.l.b16 %v128
    %v667 = vunpack.c.h.b16 %v128
    %v668 = vunpack.c.l.b16 %v129
    %v669 = vunpack.c.h.b16 %v129
    %v670 = vunpack.c.l.b16 %v130
    %v671 = vunpack.c.h.b16 %v130
    %v672 = vunpack.c.l.b16 %v131
    %v673 = vunpack.c.h.b16 %v131
    %v674 = vunpack.c.l.b16 %v132
    %v675 = vunpack.c.h.b16 %v132
    %v676 = vunpack.c.l.b16 %v133
    %v677 = vunpack.c.h.b16 %v133
    %v678 = vunpack.c.l.b16 %v134
    %v679 = vunpack.c.h.b16 %v134
    %v680 = vunpack.c.l.b16 %v135
    %v681 = vunpack.c.h.b16 %v135
    %v682 = vunpack.c.l.b16 %v136
    %v683 = vunpack.c.h.b16 %v136
    %v684 = vunpack.c.l.b16 %v137
    %v685 = vunpack.c.h.b16 %v137
    %v686 = vunpack.c.l.b16 %v138
    %v687 = vunpack.c.h.b16 %v138
    %v688 = vunpack.c.l.b16 %v139
    %v689 = vunpack.c.h.b16 %v139
    %v690 = vunpack.c.l.b16 %v140
    %v691 = vunpack.c.h.b16 %v140
    %v692 = vunpack.c.l.b16 %v141
    %v693 = vunpack.c.h.b16 %v141
    %v694 = vunpack.c.l.b16 %v142
    %v695 = vunpack.c.h.b16 %v142
    %v696 = vunpack.c.l.b16 %v143
    %v697 = vunpack.c.h.b16 %v143
    %v698 = vunpack.c.l.b16 %v144
    %v699 = vunpack.c.h.b16 %v144
    %v700 = vunpack.c.l.b16 %v145
    %v701 = vunpack.c.h.b16 %v145
    %v702 = vunpack.c.l.b16 %v146
    %v703 = vunpack.c.h.b16 %v146
    %v704 = vunpack.c.l.b16 %v147
    %v705 = vunpack.c.h.b16 %v147
    %v706 = vunpack.c.l.b16 %v148
    %v707 = vunpack.c.h.b16 %v148
    %v708 = vunpack.c.l.b16 %v149
    %v709 = vunpack.c.h.b16 %v149
    %v710 = vunpack.c.l.b16 %v150
    %v711 = vunpack.c.h.b16 %v150
    %v712 = vunpack.c.l.b16 %v151
    %v713 = vunpack.c.h.b16 %v151
    %v714 = vunpack.c.l.b16 %v152
    %v715 = vunpack.c.h.b16 %v152
    %v716 = vunpack.c.l.b16 %v153
    %v717 = vunpack.c.h.b16 %v153
    %v718 = vunpack.c.l.b16 %v154
    %v719 = vunpack.c.h.b16 %v154
    %v720 = vunpack.c.l.b16 %v155
    %v721 = vunpack.c.h.b16 %v155
    %v722 = vunpack.c.l.b16 %v156
    %v723 = vunpack.c.h.b16 %v156
    %v724 = vunpack.c.l.b16 %v157
    %v725 = vunpack.c.h.b16 %v157
    %v726 = vunpack.c.l.b16 %v158
    %v727 = vunpack.c.h.b16 %v158
    %v728 = vunpack.c.l.b16 %v159
    %v729 = vunpack.c.h.b16 %v159
    %v730 = vunpack.c.l.b16 %v160
    %v731 = vunpack.c.h.b16 %v160
    %v732 = vunpack.c.l.b16 %v161
    %v733 = vunpack.c.h.b16 %v161
    %v734 = vunpack.c.l.b16 %v162
    %v735 = vunpack.c.h.b16 %v162
    %v736 = vunpack.c.l.b16 %v163
    %v737 = vunpack.c.h.b16 %v163
    %v738 = vunpack.c.l.b16 %v164
    %v739 = vunpack.c.h.b16 %v164
    %v740 = vunpack.c.l.b16 %v165
    %v741 = vunpack.c.h.b16 %v165
    %v742 = vunpack.c.l.b16 %v166
    %v743 = vunpack.c.h.b16 %v166
    %v744 = vunpack.c.l.b16 %v167
    %v745 = vunpack.c.h.b16 %v167
    %v746 = vunpack.c.l.b16 %v168
    %v747 = vunpack.c.h.b16 %v168
    %v748 = vunpack.c.l.b16 %v169
    %v749 = vunpack.c.h.b16 %v169
    %v750 = vunpack.c.l.b16 %v170
    %v751 = vunpack.c.h.b16 %v170
    %v752 = vunpack.c.l.b16 %v171
    %v753 = vunpack.c.h.b16 %v171
    %v754 = vunpack.c.l.b16 %v172
    %v755 = vunpack.c.h.b16 %v172
    %v756 = vunpack.c.l.b16 %v173
    %v757 = vunpack.c.h.b16 %v173
    %v758 = vunpack.c.l.b16 %v174
    %v759 = vunpack.c.h.b16 %v174
    %v760 = vunpack.c.l.b16 %v175
    %v761 = vunpack.c.h.b16 %v175
    %v762 = vunpack.c.l.b16 %v176
    %v763 = vunpack.c.h.b16 %v176
    %v764 = vunpack.c.l.b16 %v177
    %v765 = vunpack.c.h.b16 %v177
    %v766 = vunpack.c.l.b16 %v178
    %v767 = vunpack.c.h.b16 %v178
    %v768 = vunpack.c.l.b16 %v179
    %v769 = vunpack.c.h.b16 %v179
    %v770 = vunpack.c.l.b16 %v180
    %v771 = vunpack.c.h.b16 %v180
    %v772 = vunpack.c.l.b16 %v181
    %v773 = vunpack.c.h.b16 %v181
    %v774 = vunpack.c.l.b16 %v182
    %v775 = vunpack.c.h.b16 %v182
    %v776 = vunpack.c.l.b16 %v183
    %v777 = vunpack.c.h.b16 %v183
    %v778 = vunpack.c.l.b16 %v184
    %v779 = vunpack.c.h.b16 %v184
    %v780 = vunpack.c.l.b16 %v185
    %v781 = vunpack.c.h.b16 %v185
    %v782 = vunpack.c.l.b16 %v186
    %v783 = vunpack.c.h.b16 %v186
    %v784 = vunpack.c.l.b16 %v187
    %v785 = vunpack.c.h.b16 %v187
    %v786 = vunpack.c.l.b16 %v188
    %v787 = vunpack.c.h.b16 %v188
    %v788 = vunpack.c.l.b16 %v189
    %v789 = vunpack.c.h.b16 %v189
    %v790 = vunpack.c.l.b16 %v190
    %v791 = vunpack.c.h.b16 %v190
    %v792 = vunpack.c.l.b16 %v191
    %v793 = vunpack.c.h.b16 %v191
    %v794 = vunpack.c.l.b16 %v192
    %v795 = vunpack.c.h.b16 %v192
    %v796 = vunpack.c.l.b16 %v193
    %v797 = vunpack.c.h.b16 %v193
    %v798 = vunpack.c.l.b16 %v194
    %v799 = vunpack.c.h.b16 %v194
    %v800 = vunpack.c.l.b16 %v195
    %v801 = vunpack.c.h.b16 %v195
    %v802 = vunpack.c.l.b16 %v196
    %v803 = vunpack.c.h.b16 %v196
    %v804 = vunpack.c.l.b16 %v197
    %v805 = vunpack.c.h.b16 %v197
    %v806 = vunpack.c.l.b16 %v198
    %v807 = vunpack.c.h.b16 %v198
    %v808 = vunpack.c.l.b16 %v199
    %v809 = vunpack.c.h.b16 %v199
    %v810 = vunpack.c.l.b16 %v200
    %v811 = vunpack.c.h.b16 %v200
    %v812 = vunpack.c.l.b16 %v201
    %v813 = vunpack.c.h.b16 %v201
    %v814 = vunpack.c.l.b16 %v202
    %v815 = vunpack.c.h.b16 %v202
    %v816 = vunpack.c.l.b16 %v203
    %v817 = vunpack.c.h.b16 %v203
    %v818 = vunpack.c.l.b16 %v204
    %v819 = vunpack.c.h.b16 %v204
    %v820 = vunpack.c.l.b16 %v205
    %v821 = vunpack.c.h.b16 %v205
    %v822 = vunpack.c.l.b16 %v206
    %v823 = vunpack.c.h.b16 %v206
    %v824 = vunpack.c.l.b16 %v207
    %v825 = vunpack.c.h.b16 %v207
    %v826 = vunpack.c.l.b16 %v208
    %v827 = vunpack.c.h.b16 %v208
    %v828 = vunpack.c.l.b16 %v209
    %v829 = vunpack.c.h.b16 %v209
    %v830 = vunpack.c.l.b16 %v210
    %v831 = vunpack.c.h.b16 %v210
    %v832 = vunpack.c.l.b16 %v211
    %v833 = vunpack.c.h.b16 %v211
    %v834 = vunpack.c.l.b16 %v212
    %v835 = vunpack.c.h.b16 %v212
    %v836 = vunpack.c.l.b16 %v213
    %v837 = vunpack.c.h.b16 %v213
    %v838 = vunpack.c.l.b16 %v214
    %v839 = vunpack.c.h.b16 %v214
    %v840 = vunpack.c.l.b16 %v215
    %v841 = vunpack.c.h.b16 %v215
    %v842 = vunpack.c.l.b16 %v216
    %v843 = vunpack.c.h.b16 %v216
    %v844 = vunpack.c.l.b16 %v217
    %v845 = vunpack.c.h.b16 %v217
    %v846 = vunpack.c.l.b16 %v218
    %v847 = vunpack.c.h.b16 %v218
    %v848 = vunpack.c.l.b16 %v219
    %v849 = vunpack.c.h.b16 %v219
    %v850 = vunpack.c.l.b16 %v220
    %v851 = vunpack.c.h.b16 %v220
    %v852 = vunpack.c.l.b16 %v221
    %v853 = vunpack.c.h.b16 %v221
    %v854 = vunpack.c.l.b16 %v222
    %v855 = vunpack.c.h.b16 %v222
    %v856 = vunpack.c.l.b16 %v223
    %v857 = vunpack.c.h.b16 %v223
    %v858 = vunpack.c.l.b16 %v224
    %v859 = vunpack.c.h.b16 %v224
    %v860 = vunpack.c.l.b16 %v225
    %v861 = vunpack.c.h.b16 %v225
    %v862 = vunpack.c.l.b16 %v226
    %v863 = vunpack.c.h.b16 %v226
    %v864 = vunpack.c.l.b16 %v227
    %v865 = vunpack.c.h.b16 %v227
    %v866 = vunpack.c.l.b16 %v228
    %v867 = vunpack.c.h.b16 %v228
    %v868 = vunpack.c.l.b16 %v229
    %v869 = vunpack.c.h.b16 %v229
    %v870 = vunpack.c.l.b16 %v230
    %v871 = vunpack.c.h.b16 %v230
    %v872 = vunpack.c.l.b16 %v231
    %v873 = vunpack.c.h.b16 %v231
    %v874 = vunpack.c.l.b16 %v232
    %v875 = vunpack.c.h.b16 %v232
    %v876 = vunpack.c.l.b16 %v233
    %v877 = vunpack.c.h.b16 %v233
    %v878 = vunpack.c.l.b16 %v234
    %v879 = vunpack.c.h.b16 %v234
    %v880 = vunpack.c.l.b16 %v235
    %v881 = vunpack.c.h.b16 %v235
    %v882 = vunpack.c.l.b16 %v236
    %v883 = vunpack.c.h.b16 %v236
    %v884 = vunpack.c.l.b16 %v237
    %v885 = vunpack.c.h.b16 %v237
    %v886 = vunpack.c.l.b16 %v238
    %v887 = vunpack.c.h.b16 %v238
    %v888 = vunpack.c.l.b16 %v239
    %v889 = vunpack.c.h.b16 %v239
    %v890 = vunpack.c.l.b16 %v240
    %v891 = vunpack.c.h.b16 %v240
    %v892 = vunpack.c.l.b16 %v241
    %v893 = vunpack.c.h.b16 %v241
    %v894 = vunpack.c.l.b16 %v242
    %v895 = vunpack.c.h.b16 %v242
    %v896 = vunpack.c.l.b16 %v243
    %v897 = vunpack.c.h.b16 %v243
    %v898 = vunpack.c.l.b16 %v244
    %v899 = vunpack.c.h.b16 %v244
    %v900 = vunpack.c.l.b16 %v245
    %v901 = vunpack.c.h.b16 %v245
    %v902 = vunpack.c.l.b16 %v246
    %v903 = vunpack.c.h.b16 %v246
    %v904 = vunpack.c.l.b16 %v247
    %v905 = vunpack.c.h.b16 %v247
    %v906 = vunpack.c.l.b16 %v248
    %v907 = vunpack.c.h.b16 %v248
    %v908 = vunpack.c.l.b16 %v249
    %v909 = vunpack.c.h.b16 %v249
    %v910 = vunpack.c.l.b16 %v250
    %v911 = vunpack.c.h.b16 %v250
    %v912 = vunpack.c.l.b16 %v251
    %v913 = vunpack.c.h.b16 %v251
    %v914 = vunpack.c.l.b16 %v252
    %v915 = vunpack.c.h.b16 %v252
    %v916 = vunpack.c.l.b16 %v253
    %v917 = vunpack.c.h.b16 %v253
    %v918 = vunpack.c.l.b16 %v254
    %v919 = vunpack.c.h.b16 %v254
    %v920 = vunpack.c.l.b16 %v255
    %v921 = vunpack.c.h.b16 %v255
    %v922 = vunpack.c.l.b16 %v256
    %v923 = vunpack.c.h.b16 %v256
    %v924 = vunpack.c.l.b16 %v257
    %v925 = vunpack.c.h.b16 %v257
    %v926 = vunpack.c.l.b16 %v258
    %v927 = vunpack.c.h.b16 %v258
    %v928 = vunpack.c.l.b16 %v259
    %v929 = vunpack.c.h.b16 %v259
    %v930 = vunpack.c.l.b16 %v260
    %v931 = vunpack.c.h.b16 %v260
    %v932 = vunpack.c.l.b16 %v261
    %v933 = vunpack.c.h.b16 %v261
    %v934 = vunpack.c.l.b16 %v262
    %v935 = vunpack.c.h.b16 %v262
    %v936 = vunpack.c.l.b16 %v263
    %v937 = vunpack.c.h.b16 %v263
    %v938 = vunpack.c.l.b16 %v264
    %v939 = vunpack.c.h.b16 %v264
    %v940 = vunpack.c.l.b16 %v265
    %v941 = vunpack.c.h.b16 %v265
    %v942 = vunpack.c.l.b16 %v266
    %v943 = vunpack.c.h.b16 %v266
    %v944 = vunpack.c.l.b16 %v267
    %v945 = vunpack.c.h.b16 %v267
    %v946 = vunpack.c.l.b16 %v268
    %v947 = vunpack.c.h.b16 %v268
    %v948 = vunpack.c.l.b16 %v269
    %v949 = vunpack.c.h.b16 %v269
    %v950 = vunpack.c.l.b16 %v270
    %v951 = vunpack.c.h.b16 %v270
    %v952 = vunpack.c.l.b16 %v271
    %v953 = vunpack.c.h.b16 %v271
    %v954 = vunpack.c.l.b16 %v272
    %v955 = vunpack.c.h.b16 %v272
    %v956 = vunpack.c.l.b16 %v273
    %v957 = vunpack.c.h.b16 %v273
    %v958 = vunpack.c.l.b16 %v274
    %v959 = vunpack.c.h.b16 %v274
    %v960 = vunpack.c.l.b16 %v275
    %v961 = vunpack.c.h.b16 %v275
    %v962 = vunpack.c.l.b16 %v276
    %v963 = vunpack.c.h.b16 %v276
    %v964 = vunpack.c.l.b16 %v277
    %v965 = vunpack.c.h.b16 %v277
    %v966 = vunpack.c.l.b16 %v278
    %v967 = vunpack.c.h.b16 %v278
    %v968 = vunpack.c.l.b16 %v279
    %v969 = vunpack.c.h.b16 %v279
    %v970 = vunpack.c.l.b16 %v280
    %v971 = vunpack.c.h.b16 %v280
    %v972 = vunpack.c.l.b16 %v281
    %v973 = vunpack.c.h.b16 %v281
    %v974 = vunpack.c.l.b16 %v282
    %v975 = vunpack.c.h.b16 %v282
    %v976 = vunpack.c.l.b16 %v283
    %v977 = vunpack.c.h.b16 %v283
    %v978 = vunpack.c.l.b16 %v284
    %v979 = vunpack.c.h.b16 %v284
    %v980 = vunpack.c.l.b16 %v285
    %v981 = vunpack.c.h.b16 %v285
    %v982 = vunpack.c.l.b16 %v286
    %v983 = vunpack.c.h.b16 %v286
    %v984 = vunpack.c.l.b16 %v287
    %v985 = vunpack.c.h.b16 %v287
    %v986 = vunpack.c.l.b16 %v288
    %v987 = vunpack.c.h.b16 %v288
    %v988 = vunpack.c.l.b16 %v289
    %v989 = vunpack.c.h.b16 %v289
    %v990 = vunpack.c.l.b16 %v290
    %v991 = vunpack.c.h.b16 %v290
    %v992 = vunpack.c.l.b16 %v291
    %v993 = vunpack.c.h.b16 %v291
    %v994 = vunpack.c.l.b16 %v292
    %v995 = vunpack.c.h.b16 %v292
    %v996 = vunpack.c.l.b16 %v293
    %v997 = vunpack.c.h.b16 %v293
    %v998 = vunpack.c.l.b16 %v294
    %v999 = vunpack.c.h.b16 %v294
    %v1000 = vunpack.c.l.b16 %v295
    %v1001 = vunpack.c.h.b16 %v295
    %v1002 = vunpack.c.l.b16 %v296
    %v1003 = vunpack.c.h.b16 %v296
    %v1004 = vunpack.c.l.b16 %v297
    %v1005 = vunpack.c.h.b16 %v297
    %v1006 = vunpack.c.l.b16 %v298
    %v1007 = vunpack.c.h.b16 %v298
    %v1008 = vunpack.c.l.b16 %v299
    %v1009 = vunpack.c.h.b16 %v299
    %v1010 = vunpack.c.l.b16 %v300
    %v1011 = vunpack.c.h.b16 %v300
    %v1012 = vunpack.c.l.b16 %v301
    %v1013 = vunpack.c.h.b16 %v301
    %v1014 = vunpack.c.l.b16 %v302
    %v1015 = vunpack.c.h.b16 %v302
    %v1016 = vunpack.c.l.b16 %v303
    %v1017 = vunpack.c.h.b16 %v303
    %v1018 = vunpack.c.l.b16 %v304
    %v1019 = vunpack.c.h.b16 %v304
    %v1020 = vunpack.c.l.b16 %v305
    %v1021 = vunpack.c.h.b16 %v305
    %v1022 = vunpack.c.l.b16 %v306
    %v1023 = vunpack.c.h.b16 %v306
    %v1024 = vunpack.c.l.b16 %v307
    %v1025 = vunpack.c.h.b16 %v307
    %v1026 = vunpack.c.l.b16 %v308
    %v1027 = vunpack.c.h.b16 %v308
    %v1028 = vunpack.c.l.b16 %v309
    %v1029 = vunpack.c.h.b16 %v309
    %v1030 = vunpack.c.l.b16 %v310
    %v1031 = vunpack.c.h.b16 %v310
    %v1032 = vunpack.c.l.b16 %v311
    %v1033 = vunpack.c.h.b16 %v311
    %v1034 = vunpack.c.l.b16 %v312
    %v1035 = vunpack.c.h.b16 %v312
    %v1036 = vunpack.c.l.b16 %v313
    %v1037 = vunpack.c.h.b16 %v313
    %v1038 = vunpack.c.l.b16 %v314
    %v1039 = vunpack.c.h.b16 %v314
    %v1040 = vunpack.c.l.b16 %v315
    %v1041 = vunpack.c.h.b16 %v315
    %v1042 = vunpack.c.l.b16 %v316
    %v1043 = vunpack.c.h.b16 %v316
    %v1044 = vunpack.c.l.b16 %v317
    %v1045 = vunpack.c.h.b16 %v317
    %v1046 = vunpack.c.l.b16 %v318
    %v1047 = vunpack.c.h.b16 %v318
    %v1048 = vunpack.c.l.b16 %v319
    %v1049 = vunpack.c.h.b16 %v319
    %v1050 = vunpack.c.l.b16 %v320
    %v1051 = vunpack.c.h.b16 %v320
    %v1052 = vunpack.c.l.b16 %v321
    %v1053 = vunpack.c.h.b16 %v321
    %v1054 = vunpack.c.l.b16 %v322
    %v1055 = vunpack.c.h.b16 %v322
    %v1056 = vunpack.c.l.b16 %v323
    %v1057 = vunpack.c.h.b16 %v323
    %v1058 = vunpack.c.l.b16 %v324
    %v1059 = vunpack.c.h.b16 %v324
    %v1060 = vunpack.c.l.b16 %v325
    %v1061 = vunpack.c.h.b16 %v325
    %v1062 = vunpack.c.l.b16 %v326
    %v1063 = vunpack.c.h.b16 %v326
    %v1064 = vunpack.c.l.b16 %v327
    %v1065 = vunpack.c.h.b16 %v327
    %v1066 = vunpack.c.l.b16 %v328
    %v1067 = vunpack.c.h.b16 %v328
    %v1068 = vunpack.c.l.b16 %v329
    %v1069 = vunpack.c.h.b16 %v329
    %v1070 = vunpack.c.l.b16 %v330
    %v1071 = vunpack.c.h.b16 %v330
    %v1072 = vunpack.c.l.b16 %v331
    %v1073 = vunpack.c.h.b16 %v331
    %v1074 = vunpack.c.l.b16 %v332
    %v1075 = vunpack.c.h.b16 %v332
    %v1076 = vunpack.c.l.b16 %v333
    %v1077 = vunpack.c.h.b16 %v333
    %v1078 = vunpack.c.l.b16 %v334
    %v1079 = vunpack.c.h.b16 %v334
    %v1080 = vunpack.c.l.b16 %v335
    %v1081 = vunpack.c.h.b16 %v335
    %v1082 = vunpack.c.l.b16 %v336
    %v1083 = vunpack.c.h.b16 %v336
    %v1084 = vunpack.c.l.b16 %v337
    %v1085 = vunpack.c.h.b16 %v337
    %v1086 = vunpack.c.l.b16 %v338
    %v1087 = vunpack.c.h.b16 %v338
    %v1088 = vunpack.c.l.b16 %v339
    %v1089 = vunpack.c.h.b16 %v339
    %v1090 = vunpack.c.l.b16 %v340
    %v1091 = vunpack.c.h.b16 %v340
    %v1092 = vunpack.c.l.b16 %v341
    %v1093 = vunpack.c.h.b16 %v341
    %v1094 = vunpack.c.l.b16 %v342
    %v1095 = vunpack.c.h.b16 %v342
    %v1096 = vunpack.c.l.b16 %v343
    %v1097 = vunpack.c.h.b16 %v343
    %v1098 = vunpack.c.l.b16 %v344
    %v1099 = vunpack.c.h.b16 %v344
    %v1100 = vunpack.c.l.b16 %v345
    %v1101 = vunpack.c.h.b16 %v345
    %v1102 = vunpack.c.l.b16 %v346
    %v1103 = vunpack.c.h.b16 %v346
    %v1104 = vunpack.c.l.b16 %v347
    %v1105 = vunpack.c.h.b16 %v347
    %v1106 = vunpack.c.l.b16 %v348
    %v1107 = vunpack.c.h.b16 %v348
    %v1108 = vunpack.c.l.b16 %v349
    %v1109 = vunpack.c.h.b16 %v349
    %v1110 = vunpack.c.l.b16 %v350
    %v1111 = vunpack.c.h.b16 %v350
    %v1112 = vunpack.c.l.b16 %v351
    %v1113 = vunpack.c.h.b16 %v351
    %v1114 = vunpack.c.l.b16 %v352
    %v1115 = vunpack.c.h.b16 %v352
    %v1116 = vunpack.c.l.b16 %v353
    %v1117 = vunpack.c.h.b16 %v353
    %v1118 = vunpack.c.l.b16 %v354
    %v1119 = vunpack.c.h.b16 %v354
    %v1120 = vunpack.c.l.b16 %v355
    %v1121 = vunpack.c.h.b16 %v355
    %v1122 = vunpack.c.l.b16 %v356
    %v1123 = vunpack.c.h.b16 %v356
    %v1124 = vunpack.c.l.b16 %v357
    %v1125 = vunpack.c.h.b16 %v357
    %v1126 = vunpack.c.l.b16 %v358
    %v1127 = vunpack.c.h.b16 %v358
    %v1128 = vunpack.c.l.b16 %v359
    %v1129 = vunpack.c.h.b16 %v359
    %v1130 = vunpack.c.l.b16 %v360
    %v1131 = vunpack.c.h.b16 %v360
    %v1132 = vunpack.c.l.b16 %v361
    %v1133 = vunpack.c.h.b16 %v361
    %v1134 = vunpack.c.l.b16 %v362
    %v1135 = vunpack.c.h.b16 %v362
    %v1136 = vunpack.c.l.b16 %v363
    %v1137 = vunpack.c.h.b16 %v363
    %v1138 = vunpack.c.l.b16 %v364
    %v1139 = vunpack.c.h.b16 %v364
    %v1140 = vunpack.c.l.b16 %v365
    %v1141 = vunpack.c.h.b16 %v365
    %v1142 = vunpack.c.l.b16 %v366
    %v1143 = vunpack.c.h.b16 %v366
    %v1144 = vunpack.c.l.b16 %v367
    %v1145 = vunpack.c.h.b16 %v367
    %v1146 = vunpack.c.l.b16 %v368
    %v1147 = vunpack.c.h.b16 %v368
    %v1148 = vunpack.c.l.b16 %v369
    %v1149 = vunpack.c.h.b16 %v369
    %v1150 = vpack.c.b16 %v640, %v638
    %v1151 = vpack.c.b16 %v641, %v639
    %v1152 = vpack.c.b16 %v644, %v642
    %v1153 = vpack.c.b16 %v645, %v643
    %v1154 = vpack.c.b16 %v648, %v646
    %v1155 = vpack.c.b16 %v649, %v647
    %v1156 = vpack.c.b16 %v652, %v650
    %v1157 = vpack.c.b16 %v653, %v651
    %v1158 = vpack.c.b16 %v656, %v654
    %v1159 = vpack.c.b16 %v657, %v655
    %v1160 = vpack.c.b16 %v660, %v658
    %v1161 = vpack.c.b16 %v661, %v659
    %v1162 = vpack.c.b16 %v664, %v662
    %v1163 = vpack.c.b16 %v665, %v663
    %v1164 = vpack.c.b16 %v668, %v666
    %v1165 = vpack.c.b16 %v669, %v667
    %v1166 = vpack.c.b16 %v672, %v670
    %v1167 = vpack.c.b16 %v673, %v671
    %v1168 = vpack.c.b16 %v676, %v674
    %v1169 = vpack.c.b16 %v677, %v675
    %v1170 = vpack.c.b16 %v680, %v678
    %v1171 = vpack.c.b16 %v681, %v679
    %v1172 = vpack.c.b16 %v684, %v682
    %v1173 = vpack.c.b16 %v685, %v683
    %v1174 = vpack.c.b16 %v688, %v686
    %v1175 = vpack.c.b16 %v689, %v687
    %v1176 = vpack.c.b16 %v692, %v690
    %v1177 = vpack.c.b16 %v693, %v691
    %v1178 = vpack.c.b16 %v696, %v694
    %v1179 = vpack.c.b16 %v697, %v695
    %v1180 = vpack.c.b16 %v700, %v698
    %v1181 = vpack.c.b16 %v701, %v699
    %v1182 = vpack.c.b16 %v704, %v702
    %v1183 = vpack.c.b16 %v705, %v703
    %v1184 = vpack.c.b16 %v708, %v706
    %v1185 = vpack.c.b16 %v709, %v707
    %v1186 = vpack.c.b16 %v712, %v710
    %v1187 = vpack.c.b16 %v713, %v711
    %v1188 = vpack.c.b16 %v716, %v714
    %v1189 = vpack.c.b16 %v717, %v715
    %v1190 = vpack.c.b16 %v720, %v718
    %v1191 = vpack.c.b16 %v721, %v719
    %v1192 = vpack.c.b16 %v724, %v722
    %v1193 = vpack.c.b16 %v725, %v723
    %v1194 = vpack.c.b16 %v728, %v726
    %v1195 = vpack.c.b16 %v729, %v727
    %v1196 = vpack.c.b16 %v732, %v730
    %v1197 = vpack.c.b16 %v733, %v731
    %v1198 = vpack.c.b16 %v736, %v734
    %v1199 = vpack.c.b16 %v737, %v735
    %v1200 = vpack.c.b16 %v740, %v738
    %v1201 = vpack.c.b16 %v741, %v739
    %v1202 = vpack.c.b16 %v744, %v742
    %v1203 = vpack.c.b16 %v745, %v743
    %v1204 = vpack.c.b16 %v748, %v746
    %v1205 = vpack.c.b16 %v749, %v747
    %v1206 = vpack.c.b16 %v752, %v750
    %v1207 = vpack.c.b16 %v753, %v751
    %v1208 = vpack.c.b16 %v756, %v754
    %v1209 = vpack.c.b16 %v757, %v755
    %v1210 = vpack.c.b16 %v760, %v758
    %v1211 = vpack.c.b16 %v761, %v759
    %v1212 = vpack.c.b16 %v764, %v762
    %v1213 = vpack.c.b16 %v765, %v763
    %v1214 = vpack.c.b16 %v768, %v766
    %v1215 = vpack.c.b16 %v769, %v767
    %v1216 = vpack.c.b16 %v772, %v770
    %v1217 = vpack.c.b16 %v773, %v771
    %v1218 = vpack.c.b16 %v776, %v774
    %v1219 = vpack.c.b16 %v777, %v775
    %v1220 = vpack.c.b16 %v780, %v778
    %v1221 = vpack.c.b16 %v781, %v779
    %v1222 = vpack.c.b16 %v784, %v782
    %v1223 = vpack.c.b16 %v785, %v783
    %v1224 = vpack.c.b16 %v788, %v786
    %v1225 = vpack.c.b16 %v789, %v787
    %v1226 = vpack.c.b16 %v792, %v790
    %v1227 = vpack.c.b16 %v793, %v791
    %v1228 = vpack.c.b16 %v796, %v794
    %v1229 = vpack.c.b16 %v797, %v795
    %v1230 = vpack.c.b16 %v800, %v798
    %v1231 = vpack.c.b16 %v801, %v799
    %v1232 = vpack.c.b16 %v804, %v802
    %v1233 = vpack.c.b16 %v805, %v803
    %v1234 = vpack.c.b16 %v808, %v806
    %v1235 = vpack.c.b16 %v809, %v807
    %v1236 = vpack.c.b16 %v812, %v810
    %v1237 = vpack.c.b16 %v813, %v811
    %v1238 = vpack.c.b16 %v816, %v814
    %v1239 = vpack.c.b16 %v817, %v815
    %v1240 = vpack.c.b16 %v820, %v818
    %v1241 = vpack.c.b16 %v821, %v819
    %v1242 = vpack.c.b16 %v824, %v822
    %v1243 = vpack.c.b16 %v825, %v823
    %v1244 = vpack.c.b16 %v828, %v826
    %v1245 = vpack.c.b16 %v829, %v827
    %v1246 = vpack.c.b16 %v832, %v830
    %v1247 = vpack.c.b16 %v833, %v831
    %v1248 = vpack.c.b16 %v836, %v834
    %v1249 = vpack.c.b16 %v837, %v835
    %v1250 = vpack.c.b16 %v840, %v838
    %v1251 = vpack.c.b16 %v841, %v839
    %v1252 = vpack.c.b16 %v844, %v842
    %v1253 = vpack.c.b16 %v845, %v843
    %v1254 = vpack.c.b16 %v848, %v846
    %v1255 = vpack.c.b16 %v849, %v847
    %v1256 = vpack.c.b16 %v852, %v850
    %v1257 = vpack.c.b16 %v853, %v851
    %v1258 = vpack.c.b16 %v856, %v854
    %v1259 = vpack.c.b16 %v857, %v855
    %v1260 = vpack.c.b16 %v860, %v858
    %v1261 = vpack.c.b16 %v861, %v859
    %v1262 = vpack.c.b16 %v864, %v862
    %v1263 = vpack.c.b16 %v865, %v863
    %v1264 = vpack.c.b16 %v868, %v866
    %v1265 = vpack.c.b16 %v869, %v867
    %v1266 = vpack.c.b16 %v872, %v870
    %v1267 = vpack.c.b16 %v873, %v871
    %v1268 = vpack.c.b16 %v876, %v874
    %v1269 = vpack.c.b16 %v877, %v875
    %v1270 = vpack.c.b16 %v880, %v878
    %v1271 = vpack.c.b16 %v881, %v879
    %v1272 = vpack.c.b16 %v884, %v882
    %v1273 = vpack.c.b16 %v885, %v883
    %v1274 = vpack.c.b16 %v888, %v886
    %v1275 = vpack.c.b16 %v889, %v887
    %v1276 = vpack.c.b16 %v892, %v890
    %v1277 = vpack.c.b16 %v893, %v891
    %v1278 = vpack.c.b16 %v896, %v894
    %v1279 = vpack.c.b16 %v897, %v895
    %v1280 = vpack.c.b16 %v900, %v898
    %v1281 = vpack.c.b16 %v901, %v899
    %v1282 = vpack.c.b16 %v904, %v902
    %v1283 = vpack.c.b16 %v905, %v903
    %v1284 = vpack.c.b16 %v908, %v906
    %v1285 = vpack.c.b16 %v909, %v907
    %v1286 = vpack.c.b16 %v912, %v910
    %v1287 = vpack.c.b16 %v913, %v911
    %v1288 = vpack.c.b16 %v916, %v914
    %v1289 = vpack.c.b16 %v917, %v915
    %v1290 = vpack.c.b16 %v920, %v918
    %v1291 = vpack.c.b16 %v921, %v919
    %v1292 = vpack.c.b16 %v924, %v922
    %v1293 = vpack.c.b16 %v925, %v923
    %v1294 = vpack.c.b16 %v928, %v926
    %v1295 = vpack.c.b16 %v929, %v927
    %v1296 = vpack.c.b16 %v932, %v930
    %v1297 = vpack.c.b16 %v933, %v931
    %v1298 = vpack.c.b16 %v936, %v934
    %v1299 = vpack.c.b16 %v937, %v935
    %v1300 = vpack.c.b16 %v940, %v938
    %v1301 = vpack.c.b16 %v941, %v939
    %v1302 = vpack.c.b16 %v944, %v942
    %v1303 = vpack.c.b16 %v945, %v943
    %v1304 = vpack.c.b16 %v948, %v946
    %v1305 = vpack.c.b16 %v949, %v947
    %v1306 = vpack.c.b16 %v952, %v950
    %v1307 = vpack.c.b16 %v953, %v951
    %v1308 = vpack.c.b16 %v956, %v954
    %v1309 = vpack.c.b16 %v957, %v955
    %v1310 = vpack.c.b16 %v960, %v958
    %v1311 = vpack.c.b16 %v961, %v959
    %v1312 = vpack.c.b16 %v964, %v962
    %v1313 = vpack.c.b16 %v965, %v963
    %v1314 = vpack.c.b16 %v968, %v966
    %v1315 = vpack.c.b16 %v969, %v967
    %v1316 = vpack.c.b16 %v972, %v970
    %v1317 = vpack.c.b16 %v973, %v971
    %v1318 = vpack.c.b16 %v976, %v974
    %v1319 = vpack.c.b16 %v977, %v975
    %v1320 = vpack.c.b16 %v980, %v978
    %v1321 = vpack.c.b16 %v981, %v979
    %v1322 = vpack.c.b16 %v984, %v982
    %v1323 = vpack.c.b16 %v985, %v983
    %v1324 = vpack.c.b16 %v988, %v986
    %v1325 = vpack.c.b16 %v989, %v987
    %v1326 = vpack.c.b16 %v992, %v990
    %v1327 = vpack.c.b16 %v993, %v991
    %v1328 = vpack.c.b16 %v996, %v994
    %v1329 = vpack.c.b16 %v997, %v995
    %v1330 = vpack.c.b16 %v1000, %v998
    %v1331 = vpack.c.b16 %v1001, %v999
    %v1332 = vpack.c.b16 %v1004, %v1002
    %v1333 = vpack.c.b16 %v1005, %v1003
    %v1334 = vpack.c.b16 %v1008, %v1006
    %v1335 = vpack.c.b16 %v1009, %v1007
    %v1336 = vpack.c.b16 %v1012, %v1010
    %v1337 = vpack.c.b16 %v1013, %v1011
    %v1338 = vpack.c.b16 %v1016, %v1014
    %v1339 = vpack.c.b16 %v1017, %v1015
    %v1340 = vpack.c.b16 %v1020, %v1018
    %v1341 = vpack.c.b16 %v1021, %v1019
    %v1342 = vpack.c.b16 %v1024, %v1022
    %v1343 = vpack.c.b16 %v1025, %v1023
    %v1344 = vpack.c.b16 %v1028, %v1026
    %v1345 = vpack.c.b16 %v1029, %v1027
    %v1346 = vpack.c.b16 %v1032, %v1030
    %v1347 = vpack.c.b16 %v1033, %v1031
    %v1348 = vpack.c.b16 %v1036, %v1034
    %v1349 = vpack.c.b16 %v1037, %v1035
    %v1350 = vpack.c.b16 %v1040, %v1038
    %v1351 = vpack.c.b16 %v1041, %v1039
    %v1352 = vpack.c.b16 %v1044, %v1042
    %v1353 = vpack.c.b16 %v1045, %v1043
    %v1354 = vpack.c.b16 %v1048, %v1046
    %v1355 = vpack.c.b16 %v1049, %v1047
    %v1356 = vpack.c.b16 %v1052, %v1050
    %v1357 = vpack.c.b16 %v1053, %v1051
    %v1358 = vpack.c.b16 %v1056, %v1054
    %v1359 = vpack.c.b16 %v1057, %v1055
    %v1360 = vpack.c.b16 %v1060, %v1058
    %v1361 = vpack.c.b16 %v1061, %v1059
    %v1362 = vpack.c.b16 %v1064, %v1062
    %v1363 = vpack.c.b16 %v1065, %v1063
    %v1364 = vpack.c.b16 %v1068, %v1066
    %v1365 = vpack.c.b16 %v1069, %v1067
    %v1366 = vpack.c.b16 %v1072, %v1070
    %v1367 = vpack.c.b16 %v1073, %v1071
    %v1368 = vpack.c.b16 %v1076, %v1074
    %v1369 = vpack.c.b16 %v1077, %v1075
    %v1370 = vpack.c.b16 %v1080, %v1078
    %v1371 = vpack.c.b16 %v1081, %v1079
    %v1372 = vpack.c.b16 %v1084, %v1082
    %v1373 = vpack.c.b16 %v1085, %v1083
    %v1374 = vpack.c.b16 %v1088, %v1086
    %v1375 = vpack.c.b16 %v1089, %v1087
    %v1376 = vpack.c.b16 %v1092, %v1090
    %v1377 = vpack.c.b16 %v1093, %v1091
    %v1378 = vpack.c.b16 %v1096, %v1094
    %v1379 = vpack.c.b16 %v1097, %v1095
    %v1380 = vpack.c.b16 %v1100, %v1098
    %v1381 = vpack.c.b16 %v1101, %v1099
    %v1382 = vpack.c.b16 %v1104, %v1102
    %v1383 = vpack.c.b16 %v1105, %v1103
    %v1384 = vpack.c.b16 %v1108, %v1106
    %v1385 = vpack.c.b16 %v1109, %v1107
    %v1386 = vpack.c.b16 %v1112, %v1110
    %v1387 = vpack.c.b16 %v1113, %v1111
    %v1388 = vpack.c.b16 %v1116, %v1114
    %v1389 = vpack.c.b16 %v1117, %v1115
    %v1390 = vpack.c.b16 %v1120, %v1118
    %v1391 = vpack.c.b16 %v1121, %v1119
    %v1392 = vpack.c.b16 %v1124, %v1122
    %v1393 = vpack.c.b16 %v1125, %v1123
    %v1394 = vpack.c.b16 %v1128, %v1126
    %v1395 = vpack.c.b16 %v1129, %v1127
    %v1396 = vpack.c.b16 %v1132, %v1130
    %v1397 = vpack.c.b16 %v1133, %v1131
    %v1398 = vpack.c.b16 %v1136, %v1134
    %v1399 = vpack.c.b16 %v1137, %v1135
    %v1400 = vpack.c.b16 %v1140, %v1138
    %v1401 = vpack.c.b16 %v1141, %v1139
    %v1402 = vpack.c.b16 %v1144, %v1142
    %v1403 = vpack.c.b16 %v1145, %v1143
    %v1404 = vpack.c.b16 %v1148, %v1146
    %v1405 = vpack.c.b16 %v1149, %v1147
    %1662 = vmatprep.subr.bf16.mxu0 %v1151
    %1663 = vmatpush1.bf16.msra.mxu0 %v1150
    %1664 = vmatprep.subr.bf16.mxu0 %v1153
    %1665 = vmatpush1.bf16.msra.mxu0 %v1152
    %1666 = vmatprep.subr.bf16.mxu0 %v1155
    %1667 = vmatpush1.bf16.msra.mxu0 %v1154
    %1668 = vmatprep.subr.bf16.mxu0 %v1157
    %1669 = vmatpush1.bf16.msra.mxu0 %v1156
    %1670 = vmatprep.subr.bf16.mxu0 %v1159
    %1671 = vmatpush1.bf16.msra.mxu0 %v1158
    %1672 = vmatprep.subr.bf16.mxu0 %v1161
    %1673 = vmatpush1.bf16.msra.mxu0 %v1160
    %1674 = vmatprep.subr.bf16.mxu0 %v1163
    %1675 = vmatpush1.bf16.msra.mxu0 %v1162
    %1676 = vmatprep.subr.bf16.mxu0 %v1165
    %1677 = vmatpush1.bf16.msra.mxu0 %v1164
    %1678 = vmatprep.subr.bf16.mxu0 %v1167
    %1679 = vmatpush1.bf16.msra.mxu0 %v1166
    %1680 = vmatprep.subr.bf16.mxu0 %v1169
    %1681 = vmatpush1.bf16.msra.mxu0 %v1168
    %1682 = vmatprep.subr.bf16.mxu0 %v1171
    %1683 = vmatpush1.bf16.msra.mxu0 %v1170
    %1684 = vmatprep.subr.bf16.mxu0 %v1173
    %1685 = vmatpush1.bf16.msra.mxu0 %v1172
    %1686 = vmatprep.subr.bf16.mxu0 %v1175
    %1687 = vmatpush1.bf16.msra.mxu0 %v1174
    %1688 = vmatprep.subr.bf16.mxu0 %v1177
    %1689 = vmatpush1.bf16.msra.mxu0 %v1176
    %1690 = vmatprep.subr.bf16.mxu0 %v1179
    %1691 = vmatpush1.bf16.msra.mxu0 %v1178
    %1692 = vmatprep.subr.bf16.mxu0 %v1181
    %1693 = vmatpush1.bf16.msra.mxu0 %v1180
    %1694 = vmatprep.mubr.bf16.mxu0 %v99
    %1695 = vmatmul.mubr.bf16.gmra.mrb[0].mxu0 %v98
    %v1696 = vpop.f32.mrb[0].mxu0
    %v1697 = vadd.f32 %v375, %v1696
    %v1698 = vpop.f32.mrb[0].mxu0
    %v1699 = vadd.f32 %v379, %v1698
    %v1700 = vpop.f32.mrb[0].mxu0
    %v1701 = vadd.f32 %v375, %v1700
    %v1702 = vpop.f32.mrb[0].mxu0
    %v1703 = vadd.f32 %v379, %v1702
    %1704 = vdwg.mxu0
    %1705 = vmatprep.subr.bf16.mxu0 %v1183
    %1706 = vmatpush1.bf16.msra.mxu0 %v1182
    %1707 = vmatprep.subr.bf16.mxu0 %v1185
    %1708 = vmatpush1.bf16.msra.mxu0 %v1184
    %1709 = vmatprep.subr.bf16.mxu0 %v1187
    %1710 = vmatpush1.bf16.msra.mxu0 %v1186
    %1711 = vmatprep.subr.bf16.mxu0 %v1189
    %1712 = vmatpush1.bf16.msra.mxu0 %v1188
    %1713 = vmatprep.subr.bf16.mxu0 %v1191
    %1714 = vmatpush1.bf16.msra.mxu0 %v1190
    %1715 = vmatprep.subr.bf16.mxu0 %v1193
    %1716 = vmatpush1.bf16.msra.mxu0 %v1192
    %1717 = vmatprep.subr.bf16.mxu0 %v1195
    %1718 = vmatpush1.bf16.msra.mxu0 %v1194
    %1719 = vmatprep.subr.bf16.mxu0 %v1197
    %1720 = vmatpush1.bf16.msra.mxu0 %v1196
    %1721 = vmatprep.subr.bf16.mxu0 %v1199
    %1722 = vmatpush1.bf16.msra.mxu0 %v1198
    %1723 = vmatprep.subr.bf16.mxu0 %v1201
    %1724 = vmatpush1.bf16.msra.mxu0 %v1200
    %1725 = vmatprep.subr.bf16.mxu0 %v1203
    %1726 = vmatpush1.bf16.msra.mxu0 %v1202
    %1727 = vmatprep.subr.bf16.mxu0 %v1205
    %1728 = vmatpush1.bf16.msra.mxu0 %v1204
    %1729 = vmatprep.subr.bf16.mxu0 %v1207
    %1730 = vmatpush1.bf16.msra.mxu0 %v1206
    %1731 = vmatprep.subr.bf16.mxu0 %v1209
    %1732 = vmatpush1.bf16.msra.mxu0 %v1208
    %1733 = vmatprep.subr.bf16.mxu0 %v1211
    %1734 = vmatpush1.bf16.msra.mxu0 %v1210
    %1735 = vmatprep.subr.bf16.mxu0 %v1213
    %1736 = vmatpush1.bf16.msra.mxu0 %v1212
    %1737 = vmatprep.mubr.bf16.mxu0 %v101
    %1738 = vmatmul.mubr.bf16.gmra.mrb[0].mxu0 %v100
    %v1739 = vpop.f32.mrb[0].mxu0
    %v1740 = vadd.f32 %v1697, %v1739
    %v1741 = vpop.f32.mrb[0].mxu0
    %v1742 = vadd.f32 %v1699, %v1741
    %v1743 = vpop.f32.mrb[0].mxu0
    %v1744 = vadd.f32 %v1701, %v1743
    %v1745 = vpop.f32.mrb[0].mxu0
    %v1746 = vadd.f32 %v1703, %v1745
    %1747 = vdwg.mxu0
    %1748 = vmatprep.subr.bf16.mxu0 %v1215
    %1749 = vmatpush1.bf16.msra.mxu0 %v1214
    %1750 = vmatprep.subr.bf16.mxu0 %v1217
    %1751 = vmatpush1.bf16.msra.mxu0 %v1216
    %1752 = vmatprep.subr.bf16.mxu0 %v1219
    %1753 = vmatpush1.bf16.msra.mxu0 %v1218
    %1754 = vmatprep.subr.bf16.mxu0 %v1221
    %1755 = vmatpush1.bf16.msra.mxu0 %v1220
    %1756 = vmatprep.subr.bf16.mxu0 %v1223
    %1757 = vmatpush1.bf16.msra.mxu0 %v1222
    %1758 = vmatprep.subr.bf16.mxu0 %v1225
    %1759 = vmatpush1.bf16.msra.mxu0 %v1224
    %1760 = vmatprep.subr.bf16.mxu0 %v1227
    %1761 = vmatpush1.bf16.msra.mxu0 %v1226
    %1762 = vmatprep.subr.bf16.mxu0 %v1229
    %1763 = vmatpush1.bf16.msra.mxu0 %v1228
    %1764 = vmatprep.subr.bf16.mxu0 %v1231
    %1765 = vmatpush1.bf16.msra.mxu0 %v1230
    %1766 = vmatprep.subr.bf16.mxu0 %v1233
    %1767 = vmatpush1.bf16.msra.mxu0 %v1232
    %1768 = vmatprep.subr.bf16.mxu0 %v1235
    %1769 = vmatpush1.bf16.msra.mxu0 %v1234
    %1770 = vmatprep.subr.bf16.mxu0 %v1237
    %1771 = vmatpush1.bf16.msra.mxu0 %v1236
    %1772 = vmatprep.subr.bf16.mxu0 %v1239
    %1773 = vmatpush1.bf16.msra.mxu0 %v1238
    %1774 = vmatprep.subr.bf16.mxu0 %v1241
    %1775 = vmatpush1.bf16.msra.mxu0 %v1240
    %1776 = vmatprep.subr.bf16.mxu0 %v1243
    %1777 = vmatpush1.bf16.msra.mxu0 %v1242
    %1778 = vmatprep.subr.bf16.mxu0 %v1245
    %1779 = vmatpush1.bf16.msra.mxu0 %v1244
    %1780 = vmatprep.mubr.bf16.mxu0 %v103
    %1781 = vmatmul.mubr.bf16.gmra.mrb[0].mxu0 %v102
    %v1782 = vpop.f32.mrb[0].mxu0
    %v1783 = vadd.f32 %v1740, %v1782
    %v1784 = vpop.f32.mrb[0].mxu0
    %v1785 = vadd.f32 %v1742, %v1784
    %v1786 = vpop.f32.mrb[0].mxu0
    %v1787 = vadd.f32 %v1744, %v1786
    %v1788 = vpop.f32.mrb[0].mxu0
    %v1789 = vadd.f32 %v1746, %v1788
    %1790 = vdwg.mxu0
    %1791 = vmatprep.subr.bf16.mxu0 %v1247
    %1792 = vmatpush1.bf16.msra.mxu0 %v1246
    %1793 = vmatprep.subr.bf16.mxu0 %v1249
    %1794 = vmatpush1.bf16.msra.mxu0 %v1248
    %1795 = vmatprep.subr.bf16.mxu0 %v1251
    %1796 = vmatpush1.bf16.msra.mxu0 %v1250
    %1797 = vmatprep.subr.bf16.mxu0 %v1253
    %1798 = vmatpush1.bf16.msra.mxu0 %v1252
    %1799 = vmatprep.subr.bf16.mxu0 %v1255
    %1800 = vmatpush1.bf16.msra.mxu0 %v1254
    %1801 = vmatprep.subr.bf16.mxu0 %v1257
    %1802 = vmatpush1.bf16.msra.mxu0 %v1256
    %1803 = vmatprep.subr.bf16.mxu0 %v1259
    %1804 = vmatpush1.bf16.msra.mxu0 %v1258
    %1805 = vmatprep.subr.bf16.mxu0 %v1261
    %1806 = vmatpush1.bf16.msra.mxu0 %v1260
    %1807 = vmatprep.subr.bf16.mxu0 %v1263
    %1808 = vmatpush1.bf16.msra.mxu0 %v1262
    %1809 = vmatprep.subr.bf16.mxu0 %v1265
    %1810 = vmatpush1.bf16.msra.mxu0 %v1264
    %1811 = vmatprep.subr.bf16.mxu0 %v1267
    %1812 = vmatpush1.bf16.msra.mxu0 %v1266
    %1813 = vmatprep.subr.bf16.mxu0 %v1269
    %1814 = vmatpush1.bf16.msra.mxu0 %v1268
    %1815 = vmatprep.subr.bf16.mxu0 %v1271
    %1816 = vmatpush1.bf16.msra.mxu0 %v1270
    %1817 = vmatprep.subr.bf16.mxu0 %v1273
    %1818 = vmatpush1.bf16.msra.mxu0 %v1272
    %1819 = vmatprep.subr.bf16.mxu0 %v1275
    %1820 = vmatpush1.bf16.msra.mxu0 %v1274
    %1821 = vmatprep.subr.bf16.mxu0 %v1277
    %1822 = vmatpush1.bf16.msra.mxu0 %v1276
    %1823 = vmatprep.mubr.bf16.mxu0 %v105
    %1824 = vmatmul.mubr.bf16.gmra.mrb[0].mxu0 %v104
    %v1825 = vpop.f32.mrb[0].mxu0
    %v1826 = vadd.f32 %v1783, %v1825
    %v1827 = vpop.f32.mrb[0].mxu0
    %v1828 = vadd.f32 %v1785, %v1827
    %v1829 = vpop.f32.mrb[0].mxu0
    %v1830 = vadd.f32 %v1787, %v1829
    %v1831 = vpop.f32.mrb[0].mxu0
    %v1832 = vadd.f32 %v1789, %v1831
    %1833 = vdwg.mxu0
    %1834 = vmatprep.subr.bf16.mxu0 %v1279
    %1835 = vmatpush1.bf16.msra.mxu0 %v1278
    %1836 = vmatprep.subr.bf16.mxu0 %v1281
    %1837 = vmatpush1.bf16.msra.mxu0 %v1280
    %1838 = vmatprep.subr.bf16.mxu0 %v1283
    %1839 = vmatpush1.bf16.msra.mxu0 %v1282
    %1840 = vmatprep.subr.bf16.mxu0 %v1285
    %1841 = vmatpush1.bf16.msra.mxu0 %v1284
    %1842 = vmatprep.subr.bf16.mxu0 %v1287
    %1843 = vmatpush1.bf16.msra.mxu0 %v1286
    %1844 = vmatprep.subr.bf16.mxu0 %v1289
    %1845 = vmatpush1.bf16.msra.mxu0 %v1288
    %1846 = vmatprep.subr.bf16.mxu0 %v1291
    %1847 = vmatpush1.bf16.msra.mxu0 %v1290
    %1848 = vmatprep.subr.bf16.mxu0 %v1293
    %1849 = vmatpush1.bf16.msra.mxu0 %v1292
    %1850 = vmatprep.subr.bf16.mxu0 %v1295
    %1851 = vmatpush1.bf16.msra.mxu0 %v1294
    %1852 = vmatprep.subr.bf16.mxu0 %v1297
    %1853 = vmatpush1.bf16.msra.mxu0 %v1296
    %1854 = vmatprep.subr.bf16.mxu0 %v1299
    %1855 = vmatpush1.bf16.msra.mxu0 %v1298
    %1856 = vmatprep.subr.bf16.mxu0 %v1301
    %1857 = vmatpush1.bf16.msra.mxu0 %v1300
    %1858 = vmatprep.subr.bf16.mxu0 %v1303
    %1859 = vmatpush1.bf16.msra.mxu0 %v1302
    %1860 = vmatprep.subr.bf16.mxu0 %v1305
    %1861 = vmatpush1.bf16.msra.mxu0 %v1304
    %1862 = vmatprep.subr.bf16.mxu0 %v1307
    %1863 = vmatpush1.bf16.msra.mxu0 %v1306
    %1864 = vmatprep.subr.bf16.mxu0 %v1309
    %1865 = vmatpush1.bf16.msra.mxu0 %v1308
    %1866 = vmatprep.mubr.bf16.mxu0 %v107
    %1867 = vmatmul.mubr.bf16.gmra.mrb[0].mxu0 %v106
    %v1868 = vpop.f32.mrb[0].mxu0
    %v1869 = vadd.f32 %v1826, %v1868
    %v1870 = vpop.f32.mrb[0].mxu0
    %v1871 = vadd.f32 %v1828, %v1870
    %v1872 = vpop.f32.mrb[0].mxu0
    %v1873 = vadd.f32 %v1830, %v1872
    %v1874 = vpop.f32.mrb[0].mxu0
    %v1875 = vadd.f32 %v1832, %v1874
    %1876 = vdwg.mxu0
    %1877 = vmatprep.subr.bf16.mxu0 %v1311
    %1878 = vmatpush1.bf16.msra.mxu0 %v1310
    %1879 = vmatprep.subr.bf16.mxu0 %v1313
    %1880 = vmatpush1.bf16.msra.mxu0 %v1312
    %1881 = vmatprep.subr.bf16.mxu0 %v1315
    %1882 = vmatpush1.bf16.msra.mxu0 %v1314
    %1883 = vmatprep.subr.bf16.mxu0 %v1317
    %1884 = vmatpush1.bf16.msra.mxu0 %v1316
    %1885 = vmatprep.subr.bf16.mxu0 %v1319
    %1886 = vmatpush1.bf16.msra.mxu0 %v1318
    %1887 = vmatprep.subr.bf16.mxu0 %v1321
    %1888 = vmatpush1.bf16.msra.mxu0 %v1320
    %1889 = vmatprep.subr.bf16.mxu0 %v1323
    %1890 = vmatpush1.bf16.msra.mxu0 %v1322
    %1891 = vmatprep.subr.bf16.mxu0 %v1325
    %1892 = vmatpush1.bf16.msra.mxu0 %v1324
    %1893 = vmatprep.subr.bf16.mxu0 %v1327
    %1894 = vmatpush1.bf16.msra.mxu0 %v1326
    %1895 = vmatprep.subr.bf16.mxu0 %v1329
    %1896 = vmatpush1.bf16.msra.mxu0 %v1328
    %1897 = vmatprep.subr.bf16.mxu0 %v1331
    %1898 = vmatpush1.bf16.msra.mxu0 %v1330
    %1899 = vmatprep.subr.bf16.mxu0 %v1333
    %1900 = vmatpush1.bf16.msra.mxu0 %v1332
    %1901 = vmatprep.subr.bf16.mxu0 %v1335
    %1902 = vmatpush1.bf16.msra.mxu0 %v1334
    %1903 = vmatprep.subr.bf16.mxu0 %v1337
    %1904 = vmatpush1.bf16.msra.mxu0 %v1336
    %1905 = vmatprep.subr.bf16.mxu0 %v1339
    %1906 = vmatpush1.bf16.msra.mxu0 %v1338
    %1907 = vmatprep.subr.bf16.mxu0 %v1341
    %1908 = vmatpush1.bf16.msra.mxu0 %v1340
    %1909 = vmatprep.mubr.bf16.mxu0 %v109
    %1910 = vmatmul.mubr.bf16.gmra.mrb[0].mxu0 %v108
    %v1911 = vpop.f32.mrb[0].mxu0
    %v1912 = vadd.f32 %v1869, %v1911
    %v1913 = vpop.f32.mrb[0].mxu0
    %v1914 = vadd.f32 %v1871, %v1913
    %v1915 = vpop.f32.mrb[0].mxu0
    %v1916 = vadd.f32 %v1873, %v1915
    %v1917 = vpop.f32.mrb[0].mxu0
    %v1918 = vadd.f32 %v1875, %v1917
    %1919 = vdwg.mxu0
    %1920 = vmatprep.subr.bf16.mxu0 %v1343
    %1921 = vmatpush1.bf16.msra.mxu0 %v1342
    %1922 = vmatprep.subr.bf16.mxu0 %v1345
    %1923 = vmatpush1.bf16.msra.mxu0 %v1344
    %1924 = vmatprep.subr.bf16.mxu0 %v1347
    %1925 = vmatpush1.bf16.msra.mxu0 %v1346
    %1926 = vmatprep.subr.bf16.mxu0 %v1349
    %1927 = vmatpush1.bf16.msra.mxu0 %v1348
    %1928 = vmatprep.subr.bf16.mxu0 %v1351
    %1929 = vmatpush1.bf16.msra.mxu0 %v1350
    %1930 = vmatprep.subr.bf16.mxu0 %v1353
    %1931 = vmatpush1.bf16.msra.mxu0 %v1352
    %1932 = vmatprep.subr.bf16.mxu0 %v1355
    %1933 = vmatpush1.bf16.msra.mxu0 %v1354
    %1934 = vmatprep.subr.bf16.mxu0 %v1357
    %1935 = vmatpush1.bf16.msra.mxu0 %v1356
    %1936 = vmatprep.subr.bf16.mxu0 %v1359
    %1937 = vmatpush1.bf16.msra.mxu0 %v1358
    %1938 = vmatprep.subr.bf16.mxu0 %v1361
    %1939 = vmatpush1.bf16.msra.mxu0 %v1360
    %1940 = vmatprep.subr.bf16.mxu0 %v1363
    %1941 = vmatpush1.bf16.msra.mxu0 %v1362
    %1942 = vmatprep.subr.bf16.mxu0 %v1365
    %1943 = vmatpush1.bf16.msra.mxu0 %v1364
    %1944 = vmatprep.subr.bf16.mxu0 %v1367
    %1945 = vmatpush1.bf16.msra.mxu0 %v1366
    %1946 = vmatprep.subr.bf16.mxu0 %v1369
    %1947 = vmatpush1.bf16.msra.mxu0 %v1368
    %1948 = vmatprep.subr.bf16.mxu0 %v1371
    %1949 = vmatpush1.bf16.msra.mxu0 %v1370
    %1950 = vmatprep.subr.bf16.mxu0 %v1373
    %1951 = vmatpush1.bf16.msra.mxu0 %v1372
    %1952 = vmatprep.mubr.bf16.mxu0 %v111
    %1953 = vmatmul.mubr.bf16.gmra.mrb[0].mxu0 %v110
    %v1954 = vpop.f32.mrb[0].mxu0
    %v1955 = vadd.f32 %v1912, %v1954
    %v1956 = vpop.f32.mrb[0].mxu0
    %v1957 = vadd.f32 %v1914, %v1956
    %v1958 = vpop.f32.mrb[0].mxu0
    %v1959 = vadd.f32 %v1916, %v1958
    %v1960 = vpop.f32.mrb[0].mxu0
    %v1961 = vadd.f32 %v1918, %v1960
    %1962 = vdwg.mxu0
    %1963 = vmatprep.subr.bf16.mxu0 %v1375
    %1964 = vmatpush1.bf16.msra.mxu0 %v1374
    %1965 = vmatprep.subr.bf16.mxu0 %v1377
    %1966 = vmatpush1.bf16.msra.mxu0 %v1376
    %1967 = vmatprep.subr.bf16.mxu0 %v1379
    %1968 = vmatpush1.bf16.msra.mxu0 %v1378
    %1969 = vmatprep.subr.bf16.mxu0 %v1381
    %1970 = vmatpush1.bf16.msra.mxu0 %v1380
    %1971 = vmatprep.subr.bf16.mxu0 %v1383
    %1972 = vmatpush1.bf16.msra.mxu0 %v1382
    %1973 = vmatprep.subr.bf16.mxu0 %v1385
    %1974 = vmatpush1.bf16.msra.mxu0 %v1384
    %1975 = vmatprep.subr.bf16.mxu0 %v1387
    %1976 = vmatpush1.bf16.msra.mxu0 %v1386
    %1977 = vmatprep.subr.bf16.mxu0 %v1389
    %1978 = vmatpush1.bf16.msra.mxu0 %v1388
    %1979 = vmatprep.subr.bf16.mxu0 %v1391
    %1980 = vmatpush1.bf16.msra.mxu0 %v1390
    %1981 = vmatprep.subr.bf16.mxu0 %v1393
    %1982 = vmatpush1.bf16.msra.mxu0 %v1392
    %1983 = vmatprep.subr.bf16.mxu0 %v1395
    %1984 = vmatpush1.bf16.msra.mxu0 %v1394
    %1985 = vmatprep.subr.bf16.mxu0 %v1397
    %1986 = vmatpush1.bf16.msra.mxu0 %v1396
    %1987 = vmatprep.subr.bf16.mxu0 %v1399
    %1988 = vmatpush1.bf16.msra.mxu0 %v1398
    %1989 = vmatprep.subr.bf16.mxu0 %v1401
    %1990 = vmatpush1.bf16.msra.mxu0 %v1400
    %1991 = vmatprep.subr.bf16.mxu0 %v1403
    %1992 = vmatpush1.bf16.msra.mxu0 %v1402
    %1993 = vmatprep.subr.bf16.mxu0 %v1405
    %1994 = vmatpush1.bf16.msra.mxu0 %v1404
    %1995 = vmatprep.mubr.bf16.mxu0 %v113
    %1996 = vmatmul.mubr.bf16.gmra.mrb[0].mxu0 %v112
    %v1997 = vpop.f32.mrb[0].mxu0
    %v1998 = vadd.f32 %v1955, %v1997
    %v1999 = vpop.f32.mrb[0].mxu0
    %v2000 = vadd.f32 %v1957, %v1999
    %v2001 = vpop.f32.mrb[0].mxu0
    %v2002 = vadd.f32 %v1959, %v2001
    %v2003 = vpop.f32.mrb[0].mxu0
    %v2004 = vadd.f32 %v1961, %v2003
    %2005 = vdwg.mxu0
    %s2006 = scalar_lea.vmem %s4, 1
    %v2007 = vld [vmem:[%s2006] ss:$8 sm:$0x3]
    %s2008 = scalar_lea.vmem %s4, 2
    %v2009 = vld [vmem:[%s2008] ss:$8 sm:$0x3]
    %v2010 = vadd.f32 %v1998, %v2000
    %2011 = vadd.xlane.f32.xlu0 %v2010
    %v2012 = vpop.xlane.xlu0 %2011
    %v2013 = vadd.f32 %v2002, %v2004
    %2014 = vadd.xlane.f32.xlu0 %v2013
    %v2015 = vpop.xlane.xlu0 %2014
    %v2016 = vrcp.pop 256.0
    %v2017 = vmul.f32 %v2012, %v2016
    %v2018 = vmul.f32 %v2015, %v2016
    %v2019 = vmul.f32 %v1998, %v1998
    %v2020 = vmul.f32 %v2000, %v2000
    %v2021 = vmul.f32 %v2002, %v2002
    %v2022 = vmul.f32 %v2004, %v2004
    %v2023 = vadd.f32 %v2019, %v2020
    %2024 = vadd.xlane.f32.xlu0 %v2023
    %v2025 = vpop.xlane.xlu0 %2024
    %v2026 = vadd.f32 %v2021, %v2022
    %2027 = vadd.xlane.f32.xlu0 %v2026
    %v2028 = vpop.xlane.xlu0 %2027
    %v2029 = vmul.f32 %v2025, %v2016
    %v2030 = vmul.f32 %v2028, %v2016
    %v2031 = vmul.f32 %v2017, %v2017
    %v2032 = vmul.f32 %v2018, %v2018
    %v2033 = vsub.f32 %v2029, %v2031
    %v2034 = vsub.f32 %v2030, %v2032
    %v2035 = vsub.f32 %v1998, %v2017
    %v2036 = vsub.f32 %v2000, %v2017
    %v2037 = vsub.f32 %v2002, %v2018
    %v2038 = vsub.f32 %v2004, %v2018
    %v2039 = vadd.f32 %v2033, 1e-05
    %v2040 = vadd.f32 %v2034, 1e-05
    %v2041 = vrsqrt.pop %v2039
    %v2042 = vrsqrt.pop %v2040
    %v2043 = vmul.f32 %v2035, %v2041
    %v2044 = vmul.f32 %v2036, %v2041
    %v2045 = vmul.f32 %v2037, %v2042
    %v2046 = vmul.f32 %v2038, %v2042
    %v2048 = vlaneseq
    %v2049 = vshrl.u32 %v2048, 7
    %v2050 = vsub.s32 0, %v2049
    %v2051 = vrot.slane %v2007, %v2050
    %v2052 = vlaneseq
    %v2053 = vshrl.u32 %v2052, 7
    %v2054 = vsub.s32 1, %v2053
    %v2055 = vrot.slane %v2007, %v2054
    %v2058 = vmul.f32 %v2043, %v2051
    %v2059 = vmul.f32 %v2044, %v2055
    %v2060 = vmul.f32 %v2045, %v2051
    %v2061 = vmul.f32 %v2046, %v2055
    %v2063 = vlaneseq
    %v2064 = vshrl.u32 %v2063, 7
    %v2065 = vsub.s32 0, %v2064
    %v2066 = vrot.slane %v2009, %v2065
    %v2067 = vlaneseq
    %v2068 = vshrl.u32 %v2067, 7
    %v2069 = vsub.s32 1, %v2068
    %v2070 = vrot.slane %v2009, %v2069
    %v2073 = vadd.f32 %v2058, %v2066
    %v2074 = vadd.f32 %v2059, %v2070
    %v2075 = vadd.f32 %v2060, %v2066
    %v2076 = vadd.f32 %v2061, %v2070
    %v2077 = vld [vmem:[%s1] sm:$0xff]
    %v2078 = vld [vmem:[%s1 + $0x8] sm:$0xff]
    %2081 = vrot.lane.b32.xlu0 %v2077, 1
    %v2082 = vpop.permute.xlu0 %2081
    %2083 = vrot.lane.b32.xlu0 %v2078, 1
    %v2084 = vpop.permute.xlu0 %2083
    %v2087 = vsub.f32 %v2077, %v2082
    %v2088 = vsub.f32 %v2078, %v2084
    %2091 = vrot.lane.b32.xlu0 %v2087, 2
    %v2092 = vpop.permute.xlu0 %2091
    %2093 = vrot.lane.b32.xlu0 %v2088, 2
    %v2094 = vpop.permute.xlu0 %2093
    %v2097 = vmul.f32 %v2087, %v2092
    %v2098 = vmul.f32 %v2088, %v2094
    %s2099 = scalar_lea.vmem %s4, 3
    %v2100 = vld [vmem:[%s2099] ss:$8 sm:$0x3]
    %2101 = vset.pattern.permute.xlu0 0
    %2102 = vperm.xlu0 %2101, %v2077
    %v2103 = vpop.permute.xlu0 %2102
    %2105 = vset.pattern.permute.xlu0 0
    %2106 = vperm.xlu0 %2105, %v2078
    %v2107 = vpop.permute.xlu0 %2106
    %v2110 = vlaneseq
    %v2111 = vshrl.u32 %v2110, 7
    %v2112 = vsub.s32 0, %v2111
    %v2113 = vrot.slane %v2100, %v2112
    %v2114 = vlaneseq
    %v2115 = vshrl.u32 %v2114, 7
    %v2116 = vsub.s32 1, %v2115
    %v2117 = vrot.slane %v2100, %v2116
    %v2120 = vmul.f32 %v2103, %v2113
    %v2121 = vmul.f32 %v2103, %v2117
    %v2122 = vmul.f32 %v2107, %v2113
    %v2123 = vmul.f32 %v2107, %v2117
    %s2124 = scalar_lea.vmem %s4, 4
    %v2125 = vld [vmem:[%s2124] ss:$8 sm:$0x3]
    %2126 = vset.pattern.permute.xlu0 1
    %2127 = vperm.xlu0 %2126, %v2077
    %v2128 = vpop.permute.xlu0 %2127
    %2130 = vset.pattern.permute.xlu0 1
    %2131 = vperm.xlu0 %2130, %v2078
    %v2132 = vpop.permute.xlu0 %2131
    %v2135 = vlaneseq
    %v2136 = vshrl.u32 %v2135, 7
    %v2137 = vsub.s32 0, %v2136
    %v2138 = vrot.slane %v2125, %v2137
    %v2139 = vlaneseq
    %v2140 = vshrl.u32 %v2139, 7
    %v2141 = vsub.s32 1, %v2140
    %v2142 = vrot.slane %v2125, %v2141
    %v2145 = vmul.f32 %v2128, %v2138
    %v2146 = vmul.f32 %v2128, %v2142
    %v2147 = vmul.f32 %v2132, %v2138
    %v2148 = vmul.f32 %v2132, %v2142
    %v2149 = vadd.f32 %v2120, %v2145
    %v2150 = vadd.f32 %v2121, %v2146
    %v2151 = vadd.f32 %v2122, %v2147
    %v2152 = vadd.f32 %v2123, %v2148
    %s2153 = scalar_lea.vmem %s4, 5
    %v2154 = vld [vmem:[%s2153] ss:$8 sm:$0x3]
    %2155 = vset.pattern.permute.xlu0 2
    %2156 = vperm.xlu0 %2155, %v2077
    %v2157 = vpop.permute.xlu0 %2156
    %2159 = vset.pattern.permute.xlu0 2
    %2160 = vperm.xlu0 %2159, %v2078
    %v2161 = vpop.permute.xlu0 %2160
    %v2164 = vlaneseq
    %v2165 = vshrl.u32 %v2164, 7
    %v2166 = vsub.s32 0, %v2165
    %v2167 = vrot.slane %v2154, %v2166
    %v2168 = vlaneseq
    %v2169 = vshrl.u32 %v2168, 7
    %v2170 = vsub.s32 1, %v2169
    %v2171 = vrot.slane %v2154, %v2170
    %v2174 = vmul.f32 %v2157, %v2167
    %v2175 = vmul.f32 %v2157, %v2171
    %v2176 = vmul.f32 %v2161, %v2167
    %v2177 = vmul.f32 %v2161, %v2171
    %v2178 = vadd.f32 %v2149, %v2174
    %v2179 = vadd.f32 %v2150, %v2175
    %v2180 = vadd.f32 %v2151, %v2176
    %v2181 = vadd.f32 %v2152, %v2177
    %s2182 = scalar_lea.vmem %s4, 6
    %v2183 = vld [vmem:[%s2182] ss:$8 sm:$0x3]
    %2184 = vset.pattern.permute.xlu0 3
    %2185 = vperm.xlu0 %2184, %v2077
    %v2186 = vpop.permute.xlu0 %2185
    %2188 = vset.pattern.permute.xlu0 3
    %2189 = vperm.xlu0 %2188, %v2078
    %v2190 = vpop.permute.xlu0 %2189
    %v2193 = vlaneseq
    %v2194 = vshrl.u32 %v2193, 7
    %v2195 = vsub.s32 0, %v2194
    %v2196 = vrot.slane %v2183, %v2195
    %v2197 = vlaneseq
    %v2198 = vshrl.u32 %v2197, 7
    %v2199 = vsub.s32 1, %v2198
    %v2200 = vrot.slane %v2183, %v2199
    %v2203 = vmul.f32 %v2186, %v2196
    %v2204 = vmul.f32 %v2186, %v2200
    %v2205 = vmul.f32 %v2190, %v2196
    %v2206 = vmul.f32 %v2190, %v2200
    %v2207 = vadd.f32 %v2178, %v2203
    %v2208 = vadd.f32 %v2179, %v2204
    %v2209 = vadd.f32 %v2180, %v2205
    %v2210 = vadd.f32 %v2181, %v2206
    %s2211 = scalar_lea.vmem %s4, 7
    %v2212 = vld [vmem:[%s2211] ss:$8 sm:$0x3]
    %2214 = vset.pattern.permute.xlu0 3
    %2215 = vperm.xlu0 %2214, %v2097
    %v2216 = vpop.permute.xlu0 %2215
    %2219 = vset.pattern.permute.xlu0 3
    %2220 = vperm.xlu0 %2219, %v2098
    %v2221 = vpop.permute.xlu0 %2220
    %v2224 = vlaneseq
    %v2225 = vshrl.u32 %v2224, 7
    %v2226 = vsub.s32 0, %v2225
    %v2227 = vrot.slane %v2212, %v2226
    %v2228 = vlaneseq
    %v2229 = vshrl.u32 %v2228, 7
    %v2230 = vsub.s32 1, %v2229
    %v2231 = vrot.slane %v2212, %v2230
    %v2234 = vmul.f32 %v2216, %v2227
    %v2235 = vmul.f32 %v2216, %v2231
    %v2236 = vmul.f32 %v2221, %v2227
    %v2237 = vmul.f32 %v2221, %v2231
    %v2238 = vadd.f32 %v2207, %v2234
    %v2239 = vadd.f32 %v2208, %v2235
    %v2240 = vadd.f32 %v2209, %v2236
    %v2241 = vadd.f32 %v2210, %v2237
    %s2242 = scalar_lea.vmem %s4, 16
    %v2243 = vld [vmem:[%s2242] ss:$8 sm:$0x3]
    %v2245 = vlaneseq
    %v2246 = vshrl.u32 %v2245, 7
    %v2247 = vsub.s32 0, %v2246
    %v2248 = vrot.slane %v2243, %v2247
    %v2249 = vlaneseq
    %v2250 = vshrl.u32 %v2249, 7
    %v2251 = vsub.s32 1, %v2250
    %v2252 = vrot.slane %v2243, %v2251
    %v2255 = vadd.f32 %v2238, %v2248
    %v2256 = vadd.f32 %v2239, %v2252
    %v2257 = vadd.f32 %v2240, %v2248
    %v2258 = vadd.f32 %v2241, %v2252
    %s2259 = scalar_lea.vmem %s4, 17
    %v2260 = vld [vmem:[%s2259] ss:$8 sm:$0x3]
    %s2261 = scalar_lea.vmem %s4, 18
    %v2262 = vld [vmem:[%s2261] ss:$8 sm:$0x3]
    %v2263 = vadd.f32 %v2255, %v2256
    %2264 = vadd.xlane.f32.xlu0 %v2263
    %v2265 = vpop.xlane.xlu0 %2264
    %v2266 = vadd.f32 %v2257, %v2258
    %2267 = vadd.xlane.f32.xlu0 %v2266
    %v2268 = vpop.xlane.xlu0 %2267
    %v2269 = vmul.f32 %v2265, %v2016
    %v2270 = vmul.f32 %v2268, %v2016
    %v2271 = vmul.f32 %v2255, %v2255
    %v2272 = vmul.f32 %v2256, %v2256
    %v2273 = vmul.f32 %v2257, %v2257
    %v2274 = vmul.f32 %v2258, %v2258
    %v2275 = vadd.f32 %v2271, %v2272
    %2276 = vadd.xlane.f32.xlu0 %v2275
    %v2277 = vpop.xlane.xlu0 %2276
    %v2278 = vadd.f32 %v2273, %v2274
    %2279 = vadd.xlane.f32.xlu0 %v2278
    %v2280 = vpop.xlane.xlu0 %2279
    %v2281 = vmul.f32 %v2277, %v2016
    %v2282 = vmul.f32 %v2280, %v2016
    %v2283 = vmul.f32 %v2269, %v2269
    %v2284 = vmul.f32 %v2270, %v2270
    %v2285 = vsub.f32 %v2281, %v2283
    %v2286 = vsub.f32 %v2282, %v2284
    %v2287 = vsub.f32 %v2255, %v2269
    %v2288 = vsub.f32 %v2256, %v2269
    %v2289 = vsub.f32 %v2257, %v2270
    %v2290 = vsub.f32 %v2258, %v2270
    %v2291 = vadd.f32 %v2285, 1e-05
    %v2292 = vadd.f32 %v2286, 1e-05
    %v2293 = vrsqrt.pop %v2291
    %v2294 = vrsqrt.pop %v2292
    %v2295 = vmul.f32 %v2287, %v2293
    %v2296 = vmul.f32 %v2288, %v2293
    %v2297 = vmul.f32 %v2289, %v2294
    %v2298 = vmul.f32 %v2290, %v2294
    %v2300 = vlaneseq
    %v2301 = vshrl.u32 %v2300, 7
    %v2302 = vsub.s32 0, %v2301
    %v2303 = vrot.slane %v2260, %v2302
    %v2304 = vlaneseq
    %v2305 = vshrl.u32 %v2304, 7
    %v2306 = vsub.s32 1, %v2305
    %v2307 = vrot.slane %v2260, %v2306
    %v2310 = vmul.f32 %v2295, %v2303
    %v2311 = vmul.f32 %v2296, %v2307
    %v2312 = vmul.f32 %v2297, %v2303
    %v2313 = vmul.f32 %v2298, %v2307
    %v2315 = vlaneseq
    %v2316 = vshrl.u32 %v2315, 7
    %v2317 = vsub.s32 0, %v2316
    %v2318 = vrot.slane %v2262, %v2317
    %v2319 = vlaneseq
    %v2320 = vshrl.u32 %v2319, 7
    %v2321 = vsub.s32 1, %v2320
    %v2322 = vrot.slane %v2262, %v2321
    %v2325 = vadd.f32 %v2310, %v2318
    %v2326 = vadd.f32 %v2311, %v2322
    %v2327 = vadd.f32 %v2312, %v2318
    %v2328 = vadd.f32 %v2313, %v2322
    %v2329 = vlaneseq
    %v2330 = vand.u32 %v2329, 127
    %v2331 = vld [vmem:[%s2] sm:$0xff]
    %v2332 = vld [vmem:[%s2 + $0x8] sm:$0xff]
    %2333 = vset.pattern.permute.xlu0 0
    %2334 = vperm.xlu0 %2333, %v2331
    %v2335 = vpop.permute.xlu0 %2334
    %2336 = vset.pattern.permute.xlu0 0
    %2337 = vperm.xlu0 %2336, %v2332
    %v2338 = vpop.permute.xlu0 %2337
    %vm2339 = vcmp.eq.s32.totalorder %v2330, %v2335
    %vm2340 = vcmp.eq.s32.totalorder %v2330, %v2338
    %v2341 = vsel %vm2339, 1, 0
    %v2342 = vsel %vm2340, 1, 0
    %v2343 = vcvt.s32.f32 %v2341
    %v2344 = vcvt.s32.f32 %v2342
    %v2345 = vpack.c.bf16 %v2344, %v2343
    %v2346 = vld [vmem:[#allocation7] sm:$0xff]
    %v2347 = vld [vmem:[#allocation7 + $0x8] sm:$0xff]
    %v2348 = vld [vmem:[#allocation7 + $0x10] sm:$0xff]
    %v2349 = vld [vmem:[#allocation7 + $0x18] sm:$0xff]
    %v2350 = vld [vmem:[#allocation7 + $0x20] sm:$0xff]
    %v2351 = vld [vmem:[#allocation7 + $0x28] sm:$0xff]
    %v2352 = vld [vmem:[#allocation7 + $0x30] sm:$0xff]
    %v2353 = vld [vmem:[#allocation7 + $0x38] sm:$0xff]
    %v2362 = vunpack.c.l.b16 %v2346
    %v2363 = vunpack.c.h.b16 %v2346
    %v2364 = vunpack.c.l.b16 %v2347
    %v2365 = vunpack.c.h.b16 %v2347
    %v2366 = vunpack.c.l.b16 %v2348
    %v2367 = vunpack.c.h.b16 %v2348
    %v2368 = vunpack.c.l.b16 %v2349
    %v2369 = vunpack.c.h.b16 %v2349
    %v2370 = vunpack.c.l.b16 %v2350
    %v2371 = vunpack.c.h.b16 %v2350
    %v2372 = vunpack.c.l.b16 %v2351
    %v2373 = vunpack.c.h.b16 %v2351
    %v2374 = vunpack.c.l.b16 %v2352
    %v2375 = vunpack.c.h.b16 %v2352
    %v2376 = vunpack.c.l.b16 %v2353
    %v2377 = vunpack.c.h.b16 %v2353
    %v2378 = vpack.c.b16 %v2364, %v2362
    %v2379 = vpack.c.b16 %v2365, %v2363
    %v2380 = vpack.c.b16 %v2368, %v2366
    %v2381 = vpack.c.b16 %v2369, %v2367
    %v2382 = vpack.c.b16 %v2372, %v2370
    %v2383 = vpack.c.b16 %v2373, %v2371
    %v2384 = vpack.c.b16 %v2376, %v2374
    %v2385 = vpack.c.b16 %v2377, %v2375
    %vm2394 = vcmask 523264
    %v2396 = vsel %vm2394, %v2345, 0
    %2398 = vmatprep.subr.bf16.mxu0 %v2379
    %2399 = vmatpush1.bf16.msra.mxu0 %v2378
    %2400 = vmatprep.subr.bf16.mxu0 %v2381
    %2401 = vmatpush1.bf16.msra.mxu0 %v2380
    %2402 = vmatprep.subr.bf16.mxu0 %v2383
    %2403 = vmatpush1.bf16.msra.mxu0 %v2382
    %2404 = vmatprep.subr.bf16.mxu0 %v2385
    %2405 = vmatpush1.bf16.msra.mxu0 %v2384
    %2406 = vmatprep.subr.bf16.mxu0 0
    %2407 = vmatpush1.bf16.msra.mxu0 0
    %2408 = vmatprep.subr.bf16.mxu0 0
    %2409 = vmatpush1.bf16.msra.mxu0 0
    %2410 = vmatprep.subr.bf16.mxu0 0
    %2411 = vmatpush1.bf16.msra.mxu0 0
    %2412 = vmatprep.subr.bf16.mxu0 0
    %2413 = vmatpush1.bf16.msra.mxu0 0
    %2414 = vmatprep.subr.bf16.mxu0 0
    %2415 = vmatpush1.bf16.msra.mxu0 0
    %2416 = vmatprep.subr.bf16.mxu0 0
    %2417 = vmatpush1.bf16.msra.mxu0 0
    %2418 = vmatprep.subr.bf16.mxu0 0
    %2419 = vmatpush1.bf16.msra.mxu0 0
    %2420 = vmatprep.subr.bf16.mxu0 0
    %2421 = vmatpush1.bf16.msra.mxu0 0
    %2422 = vmatprep.subr.bf16.mxu0 0
    %2423 = vmatpush1.bf16.msra.mxu0 0
    %2424 = vmatprep.subr.bf16.mxu0 0
    %2425 = vmatpush1.bf16.msra.mxu0 0
    %2426 = vmatprep.subr.bf16.mxu0 0
    %2427 = vmatpush1.bf16.msra.mxu0 0
    %2428 = vmatprep.subr.bf16.mxu0 0
    %2429 = vmatpush1.bf16.msra.mxu0 0
    %2430 = vmatprep.mubr.bf16.mxu0 0
    %2431 = vmatmul.mubr.bf16.gmra.mrb[0].mxu0 %v2396
    %v2432 = vpop.f32.mrb[0].mxu0
    %v2433 = vadd.f32 0.0, %v2432
    %v2434 = vpop.f32.mrb[0].mxu0
    %v2435 = vadd.f32 0.0, %v2434
    %v2436 = vpop.f32.mrb[0].mxu0
    %v2437 = vadd.f32 0.0, %v2436
    %v2438 = vpop.f32.mrb[0].mxu0
    %v2439 = vadd.f32 0.0, %v2438
    %2440 = vdwg.mxu0
    %v2441 = vadd.f32 %v2073, %v2325
    %v2442 = vadd.f32 %v2074, %v2326
    %v2443 = vadd.f32 %v2075, %v2327
    %v2444 = vadd.f32 %v2076, %v2328
    %v2445 = vadd.f32 %v2441, %v2433
    %v2446 = vadd.f32 %v2442, %v2435
    %v2447 = vadd.f32 %v2443, %v2437
    %v2448 = vadd.f32 %v2444, %v2439
    %s2449 = scalar_lea.vmem %s4, 19
    %v2450 = vld [vmem:[%s2449] ss:$8 sm:$0x3]
    %v2452 = vlaneseq
    %v2453 = vshrl.u32 %v2452, 7
    %v2454 = vsub.s32 0, %v2453
    %v2455 = vrot.slane %v2450, %v2454
    %v2456 = vlaneseq
    %v2457 = vshrl.u32 %v2456, 7
    %v2458 = vsub.s32 1, %v2457
    %v2459 = vrot.slane %v2450, %v2458
    %v2462 = vadd.f32 %v2445, %v2455
    %v2463 = vadd.f32 %v2446, %v2459
    %v2464 = vadd.f32 %v2447, %v2455
    %v2465 = vadd.f32 %v2448, %v2459
    %2466 = vst [vmem:[#allocation8] sm:$0xff] %v2462
    %2467 = vst [vmem:[#allocation8 + $0x8] sm:$0xff] %v2463
    %2468 = vst [vmem:[#allocation8 + $0x10] sm:$0xff] %v2464
    %2469 = vst [vmem:[#allocation8 + $0x18] sm:$0xff] %v2465
    // Predicated region
    $region38: #{tpu_custom_call.1} parent=1 // pred_check
      _
    $region39: #{tpu_custom_call.1} parent=1 // pred_check_branch
      %2471 = sbr.rel (0) target = $region41
    $region40: #{tpu_custom_call.1} parent=1 // pred_region
      %s2473 = ssub.s32 512, 512
      %2474 = vsyncadd [#allocation4], %s2473
      %s2475 = sshll.u32 [#allocation8], 4
      %s2476 = int_to_ptr.vmem [resolvable:$true] %s2475
      %2481 = dma.vmem_to_hbm [thread:$0]  %s2476, 512, %s6, [#allocation4], 256, 256, 16
    $region41: #{tpu_custom_call.1} parent=1 // pred_fallthru
      _
    // Predicated region
    $region42: #{tpu_custom_call.1} parent=1 // pred_check
      _
    $region43: #{tpu_custom_call.1} parent=1 // pred_check_branch
      %2483 = sbr.rel (0) target = $region45
    $region44: #{tpu_custom_call.1} parent=1 // pred_region
      %2484 = dma.done [#allocation4], 512
    $region45: #{tpu_custom_call.1} parent=1 // pred_fallthru
      _
    %2485 = vsyncpa [#allocation3], 1
    %2486 = vsyncpa [#allocation6], 1
    %2487 = vsyncpa [#allocation4], 1

</llo_original>
